<compile_context>
chip_gen: v5e
topology: v5e:2x2
jax: 0.10.0
libtpu: 0.0.40
codegen_flags: <defaults>
</compile_context>

<pallas_src>
import functools

import jax
import jax.numpy as jnp
from jax.experimental import pallas as pl
from jax.experimental.pallas import tpu as pltpu


def _self_attention_kernel(x_ref, wqkv_ref, bqkv_ref, o_ref, *, num_heads):
    BS, D = x_ref.shape
    H = num_heads
    DK = D // H

    x = x_ref[...]                                                    # (BS, D)

    # Fused QKV projection: one MXU matmul instead of three.
    qkv = jnp.dot(x, wqkv_ref[...],
                  preferred_element_type=jnp.float32) + bqkv_ref[...]  # (BS, 3D)

    # W_q's output columns were permuted wrapper-side, so this slice already is
    # the reference's *transposed* queries:  q_t[s, i, m] = q[s, m*DK + i].
    q_t = qkv[:, :D].reshape(BS, DK, H)
    k_r = qkv[:, D:2 * D].reshape(BS, H, DK)    # k_r[s, j, m] = k[s, j*DK + m]
    v_r = qkv[:, 2 * D:].reshape(BS, H, DK)     # v_r[s, h, j] = v[s, h*DK + j]

    # Per-token "attention" (degenerate: contracts head/key dims per token).
    # Both einsums contract the last dims with a leading batch dim -> they map to
    # dot_general with no operand or output transposes (no XLU swaps in-kernel).
    scores = jnp.einsum('sim,sjm->sij', q_t, k_r,
                        preferred_element_type=jnp.float32) / (DK ** 0.5)
    m = jnp.max(scores, axis=-1, keepdims=True)
    e = jnp.exp(scores - m)
    # pl.reciprocal(denom, approx=True) would move the divide to the EUP slot,
    # but adds ~1e-4 relative error; kept exact to match the reference tightly.
    p = e / jnp.sum(e, axis=-1, keepdims=True)

    # ctx[s, h, i] = sum_j v_r[s, h, j] * p[s, i, j]   (natural dot_general order)
    ctx = jnp.einsum('shj,sij->shi', v_r, p, preferred_element_type=jnp.float32)

    out = ctx.reshape(BS, D) + x                                      # residual

    # Lane-dense store: pack tokens [0, BS/2) into lanes [0, D) and tokens
    # [BS/2, BS) into lanes [D, 2D), so the output block is (BS/2, 2D) = (8, 128)
    # — full 128-lane rows, unmasked vst.  The wrapper undoes the packing.
    half = BS // 2
    o_ref[...] = jnp.concatenate([out[:half, :], out[half:, :]],
                                 axis=1).astype(o_ref.dtype)


@functools.partial(jax.jit, static_argnames=("num_heads",))
def self_attention_pallas(x, wq, wk, wv, bq, bk, bv, *, num_heads):
    B, S, D = x.shape
    H = num_heads
    DK = D // H
    assert DK * H == D
    assert H == DK, ("reference module's transpose(2,3) matmul requires "
                     "num_heads == dim_keys (dim_model == num_heads ** 2)")
    BS = B * S
    assert BS % 2 == 0, "lane-dense output packing assumes an even token count"

    # nn.Linear computes x @ W.T + b  ->  pass W.T with shape (in, out).
    # Fold the reference's transpose(2, 3) of the queries into a column
    # permutation of W_q / b_q:  q_perm[:, i*H + m] == q[:, m*DK + i].
    q_perm = jnp.arange(D).reshape(H, DK).T.reshape(-1)
    w_qkv = jnp.concatenate([wq.T[:, q_perm], wk.T, wv.T], axis=1)    # (D, 3D)
    b_qkv = jnp.concatenate([bq[q_perm], bk, bv]).reshape(1, 3 * D)   # (1, 3D)

    x2 = x.reshape(BS, D)          # collapse batch -> single grid step

    kernel = functools.partial(_self_attention_kernel, num_heads=H)

    packed = pl.pallas_call(
        kernel,
        out_shape=jax.ShapeDtypeStruct((BS // 2, 2 * D), x.dtype),
        # Collapsed grid (one step).  For much larger B*S on v7x, split tokens
        # into a size-2 "parallel" axis so both TensorCores are used.
        grid=(1,),
        in_specs=[
            pl.BlockSpec((BS, D), lambda i: (0, 0)),
            pl.BlockSpec((D, 3 * D), lambda i: (0, 0)),
            pl.BlockSpec((1, 3 * D), lambda i: (0, 0)),
        ],
        out_specs=pl.BlockSpec((BS // 2, 2 * D), lambda i: (0, 0)),
        compiler_params=pltpu.CompilerParams(dimension_semantics=("parallel",)),
    )(x2, w_qkv, b_qkv)

    # Undo the lane-dense packing (wrapper-side layout plumbing, fused under jit).
    out2 = jnp.concatenate([packed[:, :D], packed[:, D:]], axis=0)    # (BS, D)
    return out2.reshape(B, S, D)


def self_attention_ref(x, wq, wk, wv, bq, bk, bv, *, num_heads):
    """Pure-JAX reference reproducing the PyTorch forward exactly."""
    B, S, D = x.shape
    dk = D // num_heads
    q = x @ wq.T + bq
    k = x @ wk.T + bk
    v = x @ wv.T + bv
    q = q.reshape(B, S, num_heads, dk).transpose(0, 1, 3, 2)
    k = k.reshape(B, S, num_heads, dk).transpose(0, 1, 3, 2)
    v = v.reshape(B, S, num_heads, dk).transpose(0, 1, 3, 2)
    scores = jnp.matmul(q, k) / (dk ** 0.5)
    p = jax.nn.softmax(scores, axis=-1)
    wv_ = jnp.matmul(p, v)
    wv_ = wv_.transpose(0, 1, 3, 2).reshape(B, S, D)
    return wv_ + x


if __name__ == "__main__":
    B, S, H = 2, 8, 8
    D = H * H  # module requires dim_model == num_heads ** 2 (see note above)

    key = jax.random.PRNGKey(0)
    k0, k1, k2, k3, k4, k5, k6 = jax.random.split(key, 7)
    scale = 1.0 / (D ** 0.5)
    x = jax.random.normal(k0, (B, S, D), jnp.float32)
    wq = jax.random.uniform(k1, (D, D), jnp.float32, -scale, scale)
    wk = jax.random.uniform(k2, (D, D), jnp.float32, -scale, scale)
    wv = jax.random.uniform(k3, (D, D), jnp.float32, -scale, scale)
    bq = jax.random.uniform(k4, (D,), jnp.float32, -scale, scale)
    bk = jax.random.uniform(k5, (D,), jnp.float32, -scale, scale)
    bv = jax.random.uniform(k6, (D,), jnp.float32, -scale, scale)

    out = self_attention_pallas(x, wq, wk, wv, bq, bk, bv, num_heads=H)
    out = jax.block_until_ready(out)

    ref = self_attention_ref(x, wq, wk, wv, bq, bk, bv, num_heads=H)
    assert out.shape == (B, S, D)
    assert jnp.allclose(out, ref, atol=1e-4, rtol=1e-4), \
        float(jnp.max(jnp.abs(out - ref)))
    print("KERNEL_OK")
</pallas_src>

<mosaic_0001>
module attributes {stable_mosaic.version = 11 : i64} {
  func.func @_self_attention_kernel(%arg0: i32, %arg1: memref<16x64xf32, #tpu.memory_space<vmem>>, %arg2: memref<64x192xf32, #tpu.memory_space<vmem>>, %arg3: memref<1x192xf32, #tpu.memory_space<vmem>>, %arg4: memref<8x128xf32, #tpu.memory_space<vmem>>) attributes {dimension_semantics = [#tpu.dimension_semantics<parallel>], iteration_bounds = array<i64: 1>, scalar_prefetch = 0 : i64, scratch_operands = 0 : i64, tpu.core_type = #tpu.core_type<tc>, window_params = [{pipeline_mode = #tpu.pipeline_mode<synchronous>, transform_indices = @transform_0, window_bounds = array<i64: 16, 64>}, {pipeline_mode = #tpu.pipeline_mode<synchronous>, transform_indices = @transform_1, window_bounds = array<i64: 64, 192>}, {pipeline_mode = #tpu.pipeline_mode<synchronous>, transform_indices = @transform_2, window_bounds = array<i64: 1, 192>}, {pipeline_mode = #tpu.pipeline_mode<synchronous>, transform_indices = @transform_3, window_bounds = array<i64: 8, 128>}]} {
    %c0 = arith.constant 0 : index
    %c0_0 = arith.constant 0 : index
    %0 = vector.load %arg1[%c0, %c0_0] : memref<16x64xf32, #tpu.memory_space<vmem>>, vector<16x64xf32>
    %c0_1 = arith.constant 0 : index
    %c0_2 = arith.constant 0 : index
    %1 = vector.load %arg2[%c0_1, %c0_2] : memref<64x192xf32, #tpu.memory_space<vmem>>, vector<64x192xf32>
    %cst = arith.constant dense<0.000000e+00> : vector<16x192xf32>
    %2 = tpu.matmul %0, %1, %cst {dimension_numbers = #tpu.dot_dimension_numbers<[1], [0], [0], [1], [0, 0, 1, 1], [], []>} : vector<16x64xf32>, vector<64x192xf32>, vector<16x192xf32> -> vector<16x192xf32>
    %c0_3 = arith.constant 0 : index
    %c0_4 = arith.constant 0 : index
    %3 = vector.load %arg3[%c0_3, %c0_4] : memref<1x192xf32, #tpu.memory_space<vmem>>, vector<1x192xf32>
    %4 = vector.broadcast %3 : vector<1x192xf32> to vector<16x192xf32>
    %5 = arith.addf %2, %4 : vector<16x192xf32>
    %6 = vector.extract_strided_slice %5 {offsets = [0, 0], sizes = [16, 64], strides = [1, 1]} : vector<16x192xf32> to vector<16x64xf32>
    %7 = vector.shape_cast %6 : vector<16x64xf32> to vector<16x8x8xf32>
    %8 = vector.extract_strided_slice %5 {offsets = [0, 64], sizes = [16, 64], strides = [1, 1]} : vector<16x192xf32> to vector<16x64xf32>
    %9 = vector.shape_cast %8 : vector<16x64xf32> to vector<16x8x8xf32>
    %10 = vector.extract_strided_slice %5 {offsets = [0, 128], sizes = [16, 64], strides = [1, 1]} : vector<16x192xf32> to vector<16x64xf32>
    %11 = vector.shape_cast %10 : vector<16x64xf32> to vector<16x8x8xf32>
    "tpu.trace_start"() <{level = 10 : i32, message = "sim,sjm->sij"}> : () -> ()
    %cst_5 = arith.constant dense<0.000000e+00> : vector<16x8x8xf32>
    %12 = tpu.matmul %7, %9, %cst_5 {dimension_numbers = #tpu.dot_dimension_numbers<[2], [2], [1], [1], [0, 0, 0, 1, 1, 1], [0], [0]>} : vector<16x8x8xf32>, vector<16x8x8xf32>, vector<16x8x8xf32> -> vector<16x8x8xf32>
    "tpu.trace_stop"() : () -> ()
    %cst_6 = arith.constant 2.82842708 : f32
    %13 = vector.broadcast %cst_6 : f32 to vector<16x8x8xf32>
    %14 = arith.divf %12, %13 : vector<16x8x8xf32>
    %cst_7 = arith.constant dense<0xFF800000> : vector<16x8xf32>
    %15 = vector.multi_reduction <maximumf>, %14, %cst_7 [2] : vector<16x8x8xf32> to vector<16x8xf32>
    %16 = vector.shape_cast %15 : vector<16x8xf32> to vector<16x8x1xf32>
    %17 = vector.broadcast %16 : vector<16x8x1xf32> to vector<16x8x8xf32>
    %18 = arith.subf %14, %17 : vector<16x8x8xf32>
    %19 = math.exp %18 : vector<16x8x8xf32>
    %cst_8 = arith.constant dense<0.000000e+00> : vector<16x8xf32>
    %20 = vector.multi_reduction <add>, %19, %cst_8 [2] : vector<16x8x8xf32> to vector<16x8xf32>
    %21 = vector.shape_cast %20 : vector<16x8xf32> to vector<16x8x1xf32>
    %22 = vector.broadcast %21 : vector<16x8x1xf32> to vector<16x8x8xf32>
    %23 = arith.divf %19, %22 : vector<16x8x8xf32>
    "tpu.trace_start"() <{level = 10 : i32, message = "shj,sij->shi"}> : () -> ()
    %cst_9 = arith.constant dense<0.000000e+00> : vector<16x8x8xf32>
    %24 = tpu.matmul %11, %23, %cst_9 {dimension_numbers = #tpu.dot_dimension_numbers<[2], [2], [1], [1], [0, 0, 0, 1, 1, 1], [0], [0]>} : vector<16x8x8xf32>, vector<16x8x8xf32>, vector<16x8x8xf32> -> vector<16x8x8xf32>
    "tpu.trace_stop"() : () -> ()
    %25 = vector.shape_cast %24 : vector<16x8x8xf32> to vector<16x64xf32>
    %26 = arith.addf %25, %0 : vector<16x64xf32>
    %27 = vector.extract_strided_slice %26 {offsets = [0, 0], sizes = [8, 64], strides = [1, 1]} : vector<16x64xf32> to vector<8x64xf32>
    %28 = vector.extract_strided_slice %26 {offsets = [8, 0], sizes = [8, 64], strides = [1, 1]} : vector<16x64xf32> to vector<8x64xf32>
    %29 = tpu.concatenate %27, %28 in 1 : vector<8x64xf32>, vector<8x64xf32> -> vector<8x128xf32>
    %c0_10 = arith.constant 0 : index
    %c0_11 = arith.constant 0 : index
    %30 = vector.load %arg4[%c0_10, %c0_11] : memref<8x128xf32, #tpu.memory_space<vmem>>, vector<8x128xf32>
    tpu.vector_store %arg4[%c0_10, %c0_11], %29 {strides = array<i32>} : memref<8x128xf32, #tpu.memory_space<vmem>>, vector<8x128xf32>,
    return
  }
  func.func @transform_0(%arg0: i32) -> (i32, i32) {
    %c0_i32 = arith.constant 0 : i32
    %c0_i32_0 = arith.constant 0 : i32
    %c0_i32_1 = arith.constant 0 : i32
    return %c0_i32, %c0_i32_0 : i32, i32
  }
  func.func @transform_1(%arg0: i32) -> (i32, i32) {
    %c0_i32 = arith.constant 0 : i32
    %c0_i32_0 = arith.constant 0 : i32
    %c0_i32_1 = arith.constant 0 : i32
    return %c0_i32, %c0_i32_0 : i32, i32
  }
  func.func @transform_2(%arg0: i32) -> (i32, i32) {
    %c0_i32 = arith.constant 0 : i32
    %c0_i32_0 = arith.constant 0 : i32
    %c0_i32_1 = arith.constant 0 : i32
    return %c0_i32, %c0_i32_0 : i32, i32
  }
  func.func @transform_3(%arg0: i32) -> (i32, i32) {
    %c0_i32 = arith.constant 0 : i32
    %c0_i32_0 = arith.constant 0 : i32
    %c0_i32_1 = arith.constant 0 : i32
    return %c0_i32, %c0_i32_0 : i32, i32
  }
}

</mosaic_0001>

<llo_original>
// kernel: self_attention_pallas.1
$region0: #{self_attention_pallas.1}
  #allocation0 [shape = 'u32[]', space=smem, size = 0x4, offset = 0x4, fixed_abs, tag = 'smem constant byte address 0x4 - core index']
  #allocation1 [shape = 'u32[72,128]{1,0:T(1,128)}', space=vmem, size = 0x9000, scoped, tag = 'internal scratch']
  %s0 = inlined_call_operand.vmem [shape: f32[16,64], index: 0, kind: input, shape index: {}]
  %s1 = inlined_call_operand.vmem [shape: f32[64,192], index: 1, kind: input, shape index: {}]
  %s2 = inlined_call_operand.vmem [shape: f32[1,192], index: 2, kind: input, shape index: {}]
  %s3 = inlined_call_operand.vmem [shape: f32[8,128], index: 3, kind: output, shape index: {}]
  %s4 = sld [smem:[#allocation0]]
  $region22: #{self_attention_pallas.1} parent=0
    _
  %s6 = ssub.s32 1, %s4
  %s7 = scalar_select 0, %s6, %s4
  // Predicated region
  $region2: #{self_attention_pallas.1} parent=0 // pred_check
    _
  $region3: #{self_attention_pallas.1} parent=0 // pred_check_branch
    %9 = sbr.rel (0) target = $region5
  $region4: #{self_attention_pallas.1} parent=0 // pred_region
    _
  $region5: #{self_attention_pallas.1} parent=0 // pred_fallthru
    _
  // Predicated region
  $region6: #{self_attention_pallas.1} parent=0 // pred_check
    _
  $region7: #{self_attention_pallas.1} parent=0 // pred_check_branch
    %11 = sbr.rel (0) target = $region9
  $region8: #{self_attention_pallas.1} parent=0 // pred_region
    _
  $region9: #{self_attention_pallas.1} parent=0 // pred_fallthru
    _
  // Predicated region
  $region10: #{self_attention_pallas.1} parent=0 // pred_check
    _
  $region11: #{self_attention_pallas.1} parent=0 // pred_check_branch
    %13 = sbr.rel (0) target = $region13
  $region12: #{self_attention_pallas.1} parent=0 // pred_region
    _
  $region13: #{self_attention_pallas.1} parent=0 // pred_fallthru
    _
  %v14 = vld [vmem:[%s0] sm:$0xff]
  %v15 = vld [vmem:[%s0 + $0x8] sm:$0xff]
  %v16 = vld [vmem:[%s1] sm:$0xff]
  %v17 = vld [vmem:[%s1 + $0x8] sm:$0xff]
  %v18 = vld [vmem:[%s1 + $0x10] sm:$0xff]
  %v19 = vld [vmem:[%s1 + $0x18] sm:$0xff]
  %v20 = vld [vmem:[%s1 + $0x20] sm:$0xff]
  %v21 = vld [vmem:[%s1 + $0x28] sm:$0xff]
  %v22 = vld [vmem:[%s1 + $0x30] sm:$0xff]
  %v23 = vld [vmem:[%s1 + $0x38] sm:$0xff]
  %v24 = vld [vmem:[%s1 + $0x40] sm:$0xff]
  %v25 = vld [vmem:[%s1 + $0x48] sm:$0xff]
  %v26 = vld [vmem:[%s1 + $0x50] sm:$0xff]
  %v27 = vld [vmem:[%s1 + $0x58] sm:$0xff]
  %v28 = vld [vmem:[%s1 + $0x60] sm:$0xff]
  %v29 = vld [vmem:[%s1 + $0x68] sm:$0xff]
  %v30 = vld [vmem:[%s1 + $0x70] sm:$0xff]
  %v31 = vld [vmem:[%s1 + $0x78] sm:$0xff]
  %v32 = vld [vmem:[%s2] sm:$0x3]
  %v34 = vperm.slane %v32, 0
  %v35 = vperm.slane %v32, 1
  %vm38 = vcmask 523264
  %v40 = vsel %vm38, %v14, 0
  %v43 = vsel %vm38, %v15, 0
  %45 = vmatpush.msra.mxu0 0.0
  %46 = vmatpush.msra.mxu0 0.0
  %47 = vmatpush.msra.mxu0 0.0
  %48 = vmatpush.msra.mxu0 0.0
  %49 = vmatpush.msra.mxu0 0.0
  %50 = vmatpush.msra.mxu0 0.0
  %51 = vmatpush.msra.mxu0 0.0
  %52 = vmatpush.msra.mxu0 0.0
  %53 = vmatpush.msra.mxu0 %v30
  %54 = vmatpush.msra.mxu0 %v28
  %55 = vmatpush.msra.mxu0 %v26
  %56 = vmatpush.msra.mxu0 %v24
  %57 = vmatpush.msra.mxu0 %v22
  %58 = vmatpush.msra.mxu0 %v20
  %59 = vmatpush.msra.mxu0 %v18
  %60 = vmatpush.msra.mxu0 %v16
  %61 = vmatmul.f32.gmra.mxu0 %v40
  %v62 = vpop.f32.mrf.mxu0
  %v63 = vadd.f32 %v34, %v62
  %64 = vmatmul.f32.gmra.mxu0 %v43
  %v65 = vpop.f32.mrf.mxu0
  %v66 = vadd.f32 %v34, %v65
  %67 = vdwg.mxu0
  %68 = vmatpush.msra.mxu0 0.0
  %69 = vmatpush.msra.mxu0 0.0
  %70 = vmatpush.msra.mxu0 0.0
  %71 = vmatpush.msra.mxu0 0.0
  %72 = vmatpush.msra.mxu0 0.0
  %73 = vmatpush.msra.mxu0 0.0
  %74 = vmatpush.msra.mxu0 0.0
  %75 = vmatpush.msra.mxu0 0.0
  %76 = vmatpush.msra.mxu0 %v31
  %77 = vmatpush.msra.mxu0 %v29
  %78 = vmatpush.msra.mxu0 %v27
  %79 = vmatpush.msra.mxu0 %v25
  %80 = vmatpush.msra.mxu0 %v23
  %81 = vmatpush.msra.mxu0 %v21
  %82 = vmatpush.msra.mxu0 %v19
  %83 = vmatpush.msra.mxu0 %v17
  %84 = vmatmul.f32.gmra.mxu0 %v40
  %v85 = vpop.f32.mrf.mxu0
  %v86 = vadd.f32 %v35, %v85
  %87 = vmatmul.f32.gmra.mxu0 %v43
  %v88 = vpop.f32.mrf.mxu0
  %v89 = vadd.f32 %v35, %v88
  %90 = vdwg.mxu0
  %93 = vrot.lane.b32.xlu0 %v63, 120
  %v94 = vpop.permute.xlu0 %93
  %95 = vrot.lane.b32.xlu0 %v66, 120
  %v96 = vpop.permute.xlu0 %95
  %99 = vrot.lane.b32.xlu0 %v63, 112
  %v100 = vpop.permute.xlu0 %99
  %101 = vrot.lane.b32.xlu0 %v66, 112
  %v102 = vpop.permute.xlu0 %101
  %105 = vrot.lane.b32.xlu0 %v63, 104
  %v106 = vpop.permute.xlu0 %105
  %107 = vrot.lane.b32.xlu0 %v66, 104
  %v108 = vpop.permute.xlu0 %107
  %111 = vrot.lane.b32.xlu0 %v63, 96
  %v112 = vpop.permute.xlu0 %111
  %113 = vrot.lane.b32.xlu0 %v66, 96
  %v114 = vpop.permute.xlu0 %113
  %117 = vrot.lane.b32.xlu0 %v63, 88
  %v118 = vpop.permute.xlu0 %117
  %119 = vrot.lane.b32.xlu0 %v66, 88
  %v120 = vpop.permute.xlu0 %119
  %123 = vrot.lane.b32.xlu0 %v63, 80
  %v124 = vpop.permute.xlu0 %123
  %125 = vrot.lane.b32.xlu0 %v66, 80
  %v126 = vpop.permute.xlu0 %125
  %129 = vrot.lane.b32.xlu0 %v63, 72
  %v130 = vpop.permute.xlu0 %129
  %131 = vrot.lane.b32.xlu0 %v66, 72
  %v132 = vpop.permute.xlu0 %131
  %v135 = vrot.slane %v100, 4
  %vm136 = vcmask 1047556
  %v137 = vsel %vm136, %v135, %v63
  %v138 = vrot.slane %v63, 4
  %v139 = vsel %vm136, %v100, %v138
  %v141 = vunpack.c.l.s4 1983009808
  %v142 = vunpack.c.0.s8 %v141
  %v143 = vperm.slane %v137, %v142
  %v145 = vunpack.c.l.s4 1983009808
  %v146 = vunpack.c.0.s8 %v145
  %v147 = vperm.slane %v139, %v146
  %v148 = vrot.slane %v106, 4
  %v149 = vsel %vm136, %v148, %v94
  %v150 = vrot.slane %v94, 4
  %v151 = vsel %vm136, %v106, %v150
  %v153 = vunpack.c.l.s4 1983009808
  %v154 = vunpack.c.0.s8 %v153
  %v155 = vperm.slane %v149, %v154
  %v157 = vunpack.c.l.s4 1983009808
  %v158 = vunpack.c.0.s8 %v157
  %v159 = vperm.slane %v151, %v158
  %v160 = vrot.slane %v124, 4
  %v161 = vsel %vm136, %v160, %v112
  %v162 = vrot.slane %v112, 4
  %v163 = vsel %vm136, %v124, %v162
  %v165 = vunpack.c.l.s4 1983009808
  %v166 = vunpack.c.0.s8 %v165
  %v167 = vperm.slane %v161, %v166
  %v169 = vunpack.c.l.s4 1983009808
  %v170 = vunpack.c.0.s8 %v169
  %v171 = vperm.slane %v163, %v170
  %v172 = vrot.slane %v130, 4
  %v173 = vsel %vm136, %v172, %v118
  %v174 = vrot.slane %v118, 4
  %v175 = vsel %vm136, %v130, %v174
  %v177 = vunpack.c.l.s4 1983009808
  %v178 = vunpack.c.0.s8 %v177
  %v179 = vperm.slane %v173, %v178
  %v181 = vunpack.c.l.s4 1983009808
  %v182 = vunpack.c.0.s8 %v181
  %v183 = vperm.slane %v175, %v182
  %v184 = vrot.slane %v155, 4
  %v185 = vsel %vm136, %v184, %v143
  %v186 = vrot.slane %v143, 4
  %v187 = vsel %vm136, %v155, %v186
  %v189 = vunpack.c.l.s4 1934713408
  %v190 = vunpack.c.0.s8 %v189
  %v191 = vperm.slane %v185, %v190
  %v193 = vunpack.c.l.s4 1934713408
  %v194 = vunpack.c.0.s8 %v193
  %v195 = vperm.slane %v187, %v194
  %v196 = vrot.slane %v159, 4
  %v197 = vsel %vm136, %v196, %v147
  %v198 = vrot.slane %v147, 4
  %v199 = vsel %vm136, %v159, %v198
  %v201 = vunpack.c.l.s4 1934713408
  %v202 = vunpack.c.0.s8 %v201
  %v203 = vperm.slane %v197, %v202
  %v205 = vunpack.c.l.s4 1934713408
  %v206 = vunpack.c.0.s8 %v205
  %v207 = vperm.slane %v199, %v206
  %v208 = vrot.slane %v179, 4
  %v209 = vsel %vm136, %v208, %v167
  %v210 = vrot.slane %v167, 4
  %v211 = vsel %vm136, %v179, %v210
  %v213 = vunpack.c.l.s4 1934713408
  %v214 = vunpack.c.0.s8 %v213
  %v215 = vperm.slane %v209, %v214
  %v217 = vunpack.c.l.s4 1934713408
  %v218 = vunpack.c.0.s8 %v217
  %v219 = vperm.slane %v211, %v218
  %v220 = vrot.slane %v183, 4
  %v221 = vsel %vm136, %v220, %v171
  %v222 = vrot.slane %v171, 4
  %v223 = vsel %vm136, %v183, %v222
  %v225 = vunpack.c.l.s4 1934713408
  %v226 = vunpack.c.0.s8 %v225
  %v227 = vperm.slane %v221, %v226
  %v229 = vunpack.c.l.s4 1934713408
  %v230 = vunpack.c.0.s8 %v229
  %v231 = vperm.slane %v223, %v230
  %v232 = vrot.slane %v215, 4
  %v233 = vsel %vm136, %v232, %v191
  %v234 = vrot.slane %v191, 4
  %v235 = vsel %vm136, %v215, %v234
  %v236 = vrot.slane %v219, 4
  %v237 = vsel %vm136, %v236, %v195
  %v238 = vrot.slane %v195, 4
  %v239 = vsel %vm136, %v219, %v238
  %v240 = vrot.slane %v227, 4
  %v241 = vsel %vm136, %v240, %v203
  %v242 = vrot.slane %v203, 4
  %v243 = vsel %vm136, %v227, %v242
  %v244 = vrot.slane %v231, 4
  %v245 = vsel %vm136, %v244, %v207
  %v246 = vrot.slane %v207, 4
  %v247 = vsel %vm136, %v231, %v246
  %v248 = vrot.slane %v102, 4
  %v249 = vsel %vm136, %v248, %v66
  %v250 = vrot.slane %v66, 4
  %v251 = vsel %vm136, %v102, %v250
  %v253 = vunpack.c.l.s4 1983009808
  %v254 = vunpack.c.0.s8 %v253
  %v255 = vperm.slane %v249, %v254
  %v257 = vunpack.c.l.s4 1983009808
  %v258 = vunpack.c.0.s8 %v257
  %v259 = vperm.slane %v251, %v258
  %v260 = vrot.slane %v108, 4
  %v261 = vsel %vm136, %v260, %v96
  %v262 = vrot.slane %v96, 4
  %v263 = vsel %vm136, %v108, %v262
  %v265 = vunpack.c.l.s4 1983009808
  %v266 = vunpack.c.0.s8 %v265
  %v267 = vperm.slane %v261, %v266
  %v269 = vunpack.c.l.s4 1983009808
  %v270 = vunpack.c.0.s8 %v269
  %v271 = vperm.slane %v263, %v270
  %v272 = vrot.slane %v126, 4
  %v273 = vsel %vm136, %v272, %v114
  %v274 = vrot.slane %v114, 4
  %v275 = vsel %vm136, %v126, %v274
  %v277 = vunpack.c.l.s4 1983009808
  %v278 = vunpack.c.0.s8 %v277
  %v279 = vperm.slane %v273, %v278
  %v281 = vunpack.c.l.s4 1983009808
  %v282 = vunpack.c.0.s8 %v281
  %v283 = vperm.slane %v275, %v282
  %v284 = vrot.slane %v132, 4
  %v285 = vsel %vm136, %v284, %v120
  %v286 = vrot.slane %v120, 4
  %v287 = vsel %vm136, %v132, %v286
  %v289 = vunpack.c.l.s4 1983009808
  %v290 = vunpack.c.0.s8 %v289
  %v291 = vperm.slane %v285, %v290
  %v293 = vunpack.c.l.s4 1983009808
  %v294 = vunpack.c.0.s8 %v293
  %v295 = vperm.slane %v287, %v294
  %v296 = vrot.slane %v267, 4
  %v297 = vsel %vm136, %v296, %v255
  %v298 = vrot.slane %v255, 4
  %v299 = vsel %vm136, %v267, %v298
  %v301 = vunpack.c.l.s4 1934713408
  %v302 = vunpack.c.0.s8 %v301
  %v303 = vperm.slane %v297, %v302
  %v305 = vunpack.c.l.s4 1934713408
  %v306 = vunpack.c.0.s8 %v305
  %v307 = vperm.slane %v299, %v306
  %v308 = vrot.slane %v271, 4
  %v309 = vsel %vm136, %v308, %v259
  %v310 = vrot.slane %v259, 4
  %v311 = vsel %vm136, %v271, %v310
  %v313 = vunpack.c.l.s4 1934713408
  %v314 = vunpack.c.0.s8 %v313
  %v315 = vperm.slane %v309, %v314
  %v317 = vunpack.c.l.s4 1934713408
  %v318 = vunpack.c.0.s8 %v317
  %v319 = vperm.slane %v311, %v318
  %v320 = vrot.slane %v291, 4
  %v321 = vsel %vm136, %v320, %v279
  %v322 = vrot.slane %v279, 4
  %v323 = vsel %vm136, %v291, %v322
  %v325 = vunpack.c.l.s4 1934713408
  %v326 = vunpack.c.0.s8 %v325
  %v327 = vperm.slane %v321, %v326
  %v329 = vunpack.c.l.s4 1934713408
  %v330 = vunpack.c.0.s8 %v329
  %v331 = vperm.slane %v323, %v330
  %v332 = vrot.slane %v295, 4
  %v333 = vsel %vm136, %v332, %v283
  %v334 = vrot.slane %v283, 4
  %v335 = vsel %vm136, %v295, %v334
  %v337 = vunpack.c.l.s4 1934713408
  %v338 = vunpack.c.0.s8 %v337
  %v339 = vperm.slane %v333, %v338
  %v341 = vunpack.c.l.s4 1934713408
  %v342 = vunpack.c.0.s8 %v341
  %v343 = vperm.slane %v335, %v342
  %v344 = vrot.slane %v327, 4
  %v345 = vsel %vm136, %v344, %v303
  %v346 = vrot.slane %v303, 4
  %v347 = vsel %vm136, %v327, %v346
  %v348 = vrot.slane %v331, 4
  %v349 = vsel %vm136, %v348, %v307
  %v350 = vrot.slane %v307, 4
  %v351 = vsel %vm136, %v331, %v350
  %v352 = vrot.slane %v339, 4
  %v353 = vsel %vm136, %v352, %v315
  %v354 = vrot.slane %v315, 4
  %v355 = vsel %vm136, %v339, %v354
  %v356 = vrot.slane %v343, 4
  %v357 = vsel %vm136, %v356, %v319
  %v358 = vrot.slane %v319, 4
  %v359 = vsel %vm136, %v343, %v358
  %360 = vrot.lane.b32.xlu0 %v63, 64
  %v361 = vpop.permute.xlu0 %360
  %362 = vrot.lane.b32.xlu0 %v66, 64
  %v363 = vpop.permute.xlu0 %362
  %364 = vrot.lane.b32.xlu0 %v94, 64
  %v365 = vpop.permute.xlu0 %364
  %366 = vrot.lane.b32.xlu0 %v96, 64
  %v367 = vpop.permute.xlu0 %366
  %368 = vrot.lane.b32.xlu0 %v100, 64
  %v369 = vpop.permute.xlu0 %368
  %370 = vrot.lane.b32.xlu0 %v102, 64
  %v371 = vpop.permute.xlu0 %370
  %372 = vrot.lane.b32.xlu0 %v106, 64
  %v373 = vpop.permute.xlu0 %372
  %374 = vrot.lane.b32.xlu0 %v108, 64
  %v375 = vpop.permute.xlu0 %374
  %376 = vrot.lane.b32.xlu0 %v112, 64
  %v377 = vpop.permute.xlu0 %376
  %378 = vrot.lane.b32.xlu0 %v114, 64
  %v379 = vpop.permute.xlu0 %378
  %380 = vrot.lane.b32.xlu0 %v118, 64
  %v381 = vpop.permute.xlu0 %380
  %382 = vrot.lane.b32.xlu0 %v120, 64
  %v383 = vpop.permute.xlu0 %382
  %384 = vrot.lane.b32.xlu0 %v124, 64
  %v385 = vpop.permute.xlu0 %384
  %386 = vrot.lane.b32.xlu0 %v126, 64
  %v387 = vpop.permute.xlu0 %386
  %388 = vrot.lane.b32.xlu0 %v130, 64
  %v389 = vpop.permute.xlu0 %388
  %390 = vrot.lane.b32.xlu0 %v132, 64
  %v391 = vpop.permute.xlu0 %390
  %v408 = vrot.slane %v369, 4
  %v409 = vsel %vm136, %v408, %v361
  %v410 = vrot.slane %v361, 4
  %v411 = vsel %vm136, %v369, %v410
  %v413 = vunpack.c.l.s4 1983009808
  %v414 = vunpack.c.0.s8 %v413
  %v415 = vperm.slane %v409, %v414
  %v417 = vunpack.c.l.s4 1983009808
  %v418 = vunpack.c.0.s8 %v417
  %v419 = vperm.slane %v411, %v418
  %v420 = vrot.slane %v373, 4
  %v421 = vsel %vm136, %v420, %v365
  %v422 = vrot.slane %v365, 4
  %v423 = vsel %vm136, %v373, %v422
  %v425 = vunpack.c.l.s4 1983009808
  %v426 = vunpack.c.0.s8 %v425
  %v427 = vperm.slane %v421, %v426
  %v429 = vunpack.c.l.s4 1983009808
  %v430 = vunpack.c.0.s8 %v429
  %v431 = vperm.slane %v423, %v430
  %v432 = vrot.slane %v385, 4
  %v433 = vsel %vm136, %v432, %v377
  %v434 = vrot.slane %v377, 4
  %v435 = vsel %vm136, %v385, %v434
  %v437 = vunpack.c.l.s4 1983009808
  %v438 = vunpack.c.0.s8 %v437
  %v439 = vperm.slane %v433, %v438
  %v441 = vunpack.c.l.s4 1983009808
  %v442 = vunpack.c.0.s8 %v441
  %v443 = vperm.slane %v435, %v442
  %v444 = vrot.slane %v389, 4
  %v445 = vsel %vm136, %v444, %v381
  %v446 = vrot.slane %v381, 4
  %v447 = vsel %vm136, %v389, %v446
  %v449 = vunpack.c.l.s4 1983009808
  %v450 = vunpack.c.0.s8 %v449
  %v451 = vperm.slane %v445, %v450
  %v453 = vunpack.c.l.s4 1983009808
  %v454 = vunpack.c.0.s8 %v453
  %v455 = vperm.slane %v447, %v454
  %v456 = vrot.slane %v427, 4
  %v457 = vsel %vm136, %v456, %v415
  %v458 = vrot.slane %v415, 4
  %v459 = vsel %vm136, %v427, %v458
  %v461 = vunpack.c.l.s4 1934713408
  %v462 = vunpack.c.0.s8 %v461
  %v463 = vperm.slane %v457, %v462
  %v465 = vunpack.c.l.s4 1934713408
  %v466 = vunpack.c.0.s8 %v465
  %v467 = vperm.slane %v459, %v466
  %v468 = vrot.slane %v431, 4
  %v469 = vsel %vm136, %v468, %v419
  %v470 = vrot.slane %v419, 4
  %v471 = vsel %vm136, %v431, %v470
  %v473 = vunpack.c.l.s4 1934713408
  %v474 = vunpack.c.0.s8 %v473
  %v475 = vperm.slane %v469, %v474
  %v477 = vunpack.c.l.s4 1934713408
  %v478 = vunpack.c.0.s8 %v477
  %v479 = vperm.slane %v471, %v478
  %v480 = vrot.slane %v451, 4
  %v481 = vsel %vm136, %v480, %v439
  %v482 = vrot.slane %v439, 4
  %v483 = vsel %vm136, %v451, %v482
  %v485 = vunpack.c.l.s4 1934713408
  %v486 = vunpack.c.0.s8 %v485
  %v487 = vperm.slane %v481, %v486
  %v489 = vunpack.c.l.s4 1934713408
  %v490 = vunpack.c.0.s8 %v489
  %v491 = vperm.slane %v483, %v490
  %v492 = vrot.slane %v455, 4
  %v493 = vsel %vm136, %v492, %v443
  %v494 = vrot.slane %v443, 4
  %v495 = vsel %vm136, %v455, %v494
  %v497 = vunpack.c.l.s4 1934713408
  %v498 = vunpack.c.0.s8 %v497
  %v499 = vperm.slane %v493, %v498
  %v501 = vunpack.c.l.s4 1934713408
  %v502 = vunpack.c.0.s8 %v501
  %v503 = vperm.slane %v495, %v502
  %v504 = vrot.slane %v487, 4
  %v505 = vsel %vm136, %v504, %v463
  %v506 = vrot.slane %v463, 4
  %v507 = vsel %vm136, %v487, %v506
  %v508 = vrot.slane %v491, 4
  %v509 = vsel %vm136, %v508, %v467
  %v510 = vrot.slane %v467, 4
  %v511 = vsel %vm136, %v491, %v510
  %v512 = vrot.slane %v499, 4
  %v513 = vsel %vm136, %v512, %v475
  %v514 = vrot.slane %v475, 4
  %v515 = vsel %vm136, %v499, %v514
  %v516 = vrot.slane %v503, 4
  %v517 = vsel %vm136, %v516, %v479
  %v518 = vrot.slane %v479, 4
  %v519 = vsel %vm136, %v503, %v518
  %v520 = vrot.slane %v371, 4
  %v521 = vsel %vm136, %v520, %v363
  %v522 = vrot.slane %v363, 4
  %v523 = vsel %vm136, %v371, %v522
  %v525 = vunpack.c.l.s4 1983009808
  %v526 = vunpack.c.0.s8 %v525
  %v527 = vperm.slane %v521, %v526
  %v529 = vunpack.c.l.s4 1983009808
  %v530 = vunpack.c.0.s8 %v529
  %v531 = vperm.slane %v523, %v530
  %v532 = vrot.slane %v375, 4
  %v533 = vsel %vm136, %v532, %v367
  %v534 = vrot.slane %v367, 4
  %v535 = vsel %vm136, %v375, %v534
  %v537 = vunpack.c.l.s4 1983009808
  %v538 = vunpack.c.0.s8 %v537
  %v539 = vperm.slane %v533, %v538
  %v541 = vunpack.c.l.s4 1983009808
  %v542 = vunpack.c.0.s8 %v541
  %v543 = vperm.slane %v535, %v542
  %v544 = vrot.slane %v387, 4
  %v545 = vsel %vm136, %v544, %v379
  %v546 = vrot.slane %v379, 4
  %v547 = vsel %vm136, %v387, %v546
  %v549 = vunpack.c.l.s4 1983009808
  %v550 = vunpack.c.0.s8 %v549
  %v551 = vperm.slane %v545, %v550
  %v553 = vunpack.c.l.s4 1983009808
  %v554 = vunpack.c.0.s8 %v553
  %v555 = vperm.slane %v547, %v554
  %v556 = vrot.slane %v391, 4
  %v557 = vsel %vm136, %v556, %v383
  %v558 = vrot.slane %v383, 4
  %v559 = vsel %vm136, %v391, %v558
  %v561 = vunpack.c.l.s4 1983009808
  %v562 = vunpack.c.0.s8 %v561
  %v563 = vperm.slane %v557, %v562
  %v565 = vunpack.c.l.s4 1983009808
  %v566 = vunpack.c.0.s8 %v565
  %v567 = vperm.slane %v559, %v566
  %v568 = vrot.slane %v539, 4
  %v569 = vsel %vm136, %v568, %v527
  %v570 = vrot.slane %v527, 4
  %v571 = vsel %vm136, %v539, %v570
  %v573 = vunpack.c.l.s4 1934713408
  %v574 = vunpack.c.0.s8 %v573
  %v575 = vperm.slane %v569, %v574
  %v577 = vunpack.c.l.s4 1934713408
  %v578 = vunpack.c.0.s8 %v577
  %v579 = vperm.slane %v571, %v578
  %v580 = vrot.slane %v543, 4
  %v581 = vsel %vm136, %v580, %v531
  %v582 = vrot.slane %v531, 4
  %v583 = vsel %vm136, %v543, %v582
  %v585 = vunpack.c.l.s4 1934713408
  %v586 = vunpack.c.0.s8 %v585
  %v587 = vperm.slane %v581, %v586
  %v589 = vunpack.c.l.s4 1934713408
  %v590 = vunpack.c.0.s8 %v589
  %v591 = vperm.slane %v583, %v590
  %v592 = vrot.slane %v563, 4
  %v593 = vsel %vm136, %v592, %v551
  %v594 = vrot.slane %v551, 4
  %v595 = vsel %vm136, %v563, %v594
  %v597 = vunpack.c.l.s4 1934713408
  %v598 = vunpack.c.0.s8 %v597
  %v599 = vperm.slane %v593, %v598
  %v601 = vunpack.c.l.s4 1934713408
  %v602 = vunpack.c.0.s8 %v601
  %v603 = vperm.slane %v595, %v602
  %v604 = vrot.slane %v567, 4
  %v605 = vsel %vm136, %v604, %v555
  %v606 = vrot.slane %v555, 4
  %v607 = vsel %vm136, %v567, %v606
  %v609 = vunpack.c.l.s4 1934713408
  %v610 = vunpack.c.0.s8 %v609
  %v611 = vperm.slane %v605, %v610
  %v613 = vunpack.c.l.s4 1934713408
  %v614 = vunpack.c.0.s8 %v613
  %v615 = vperm.slane %v607, %v614
  %v616 = vrot.slane %v599, 4
  %v617 = vsel %vm136, %v616, %v575
  %v618 = vrot.slane %v575, 4
  %v619 = vsel %vm136, %v599, %v618
  %v620 = vrot.slane %v603, 4
  %v621 = vsel %vm136, %v620, %v579
  %v622 = vrot.slane %v579, 4
  %v623 = vsel %vm136, %v603, %v622
  %v624 = vrot.slane %v611, 4
  %v625 = vsel %vm136, %v624, %v587
  %v626 = vrot.slane %v587, 4
  %v627 = vsel %vm136, %v611, %v626
  %v628 = vrot.slane %v615, 4
  %v629 = vsel %vm136, %v628, %v591
  %v630 = vrot.slane %v591, 4
  %v631 = vsel %vm136, %v615, %v630
  %634 = vrot.lane.b32.xlu0 %v86, 120
  %v635 = vpop.permute.xlu0 %634
  %636 = vrot.lane.b32.xlu0 %v89, 120
  %v637 = vpop.permute.xlu0 %636
  %640 = vrot.lane.b32.xlu0 %v86, 112
  %v641 = vpop.permute.xlu0 %640
  %642 = vrot.lane.b32.xlu0 %v89, 112
  %v643 = vpop.permute.xlu0 %642
  %646 = vrot.lane.b32.xlu0 %v86, 104
  %v647 = vpop.permute.xlu0 %646
  %648 = vrot.lane.b32.xlu0 %v89, 104
  %v649 = vpop.permute.xlu0 %648
  %652 = vrot.lane.b32.xlu0 %v86, 96
  %v653 = vpop.permute.xlu0 %652
  %654 = vrot.lane.b32.xlu0 %v89, 96
  %v655 = vpop.permute.xlu0 %654
  %658 = vrot.lane.b32.xlu0 %v86, 88
  %v659 = vpop.permute.xlu0 %658
  %660 = vrot.lane.b32.xlu0 %v89, 88
  %v661 = vpop.permute.xlu0 %660
  %664 = vrot.lane.b32.xlu0 %v86, 80
  %v665 = vpop.permute.xlu0 %664
  %666 = vrot.lane.b32.xlu0 %v89, 80
  %v667 = vpop.permute.xlu0 %666
  %670 = vrot.lane.b32.xlu0 %v86, 72
  %v671 = vpop.permute.xlu0 %670
  %672 = vrot.lane.b32.xlu0 %v89, 72
  %v673 = vpop.permute.xlu0 %672
  %v676 = vrot.slane %v641, 4
  %v677 = vsel %vm136, %v676, %v86
  %v678 = vrot.slane %v86, 4
  %v679 = vsel %vm136, %v641, %v678
  %v681 = vunpack.c.l.s4 1983009808
  %v682 = vunpack.c.0.s8 %v681
  %v683 = vperm.slane %v677, %v682
  %v685 = vunpack.c.l.s4 1983009808
  %v686 = vunpack.c.0.s8 %v685
  %v687 = vperm.slane %v679, %v686
  %v688 = vrot.slane %v647, 4
  %v689 = vsel %vm136, %v688, %v635
  %v690 = vrot.slane %v635, 4
  %v691 = vsel %vm136, %v647, %v690
  %v693 = vunpack.c.l.s4 1983009808
  %v694 = vunpack.c.0.s8 %v693
  %v695 = vperm.slane %v689, %v694
  %v697 = vunpack.c.l.s4 1983009808
  %v698 = vunpack.c.0.s8 %v697
  %v699 = vperm.slane %v691, %v698
  %v700 = vrot.slane %v665, 4
  %v701 = vsel %vm136, %v700, %v653
  %v702 = vrot.slane %v653, 4
  %v703 = vsel %vm136, %v665, %v702
  %v705 = vunpack.c.l.s4 1983009808
  %v706 = vunpack.c.0.s8 %v705
  %v707 = vperm.slane %v701, %v706
  %v709 = vunpack.c.l.s4 1983009808
  %v710 = vunpack.c.0.s8 %v709
  %v711 = vperm.slane %v703, %v710
  %v712 = vrot.slane %v671, 4
  %v713 = vsel %vm136, %v712, %v659
  %v714 = vrot.slane %v659, 4
  %v715 = vsel %vm136, %v671, %v714
  %v717 = vunpack.c.l.s4 1983009808
  %v718 = vunpack.c.0.s8 %v717
  %v719 = vperm.slane %v713, %v718
  %v721 = vunpack.c.l.s4 1983009808
  %v722 = vunpack.c.0.s8 %v721
  %v723 = vperm.slane %v715, %v722
  %v724 = vrot.slane %v695, 4
  %v725 = vsel %vm136, %v724, %v683
  %v726 = vrot.slane %v683, 4
  %v727 = vsel %vm136, %v695, %v726
  %v729 = vunpack.c.l.s4 1934713408
  %v730 = vunpack.c.0.s8 %v729
  %v731 = vperm.slane %v725, %v730
  %v733 = vunpack.c.l.s4 1934713408
  %v734 = vunpack.c.0.s8 %v733
  %v735 = vperm.slane %v727, %v734
  %v736 = vrot.slane %v699, 4
  %v737 = vsel %vm136, %v736, %v687
  %v738 = vrot.slane %v687, 4
  %v739 = vsel %vm136, %v699, %v738
  %v741 = vunpack.c.l.s4 1934713408
  %v742 = vunpack.c.0.s8 %v741
  %v743 = vperm.slane %v737, %v742
  %v745 = vunpack.c.l.s4 1934713408
  %v746 = vunpack.c.0.s8 %v745
  %v747 = vperm.slane %v739, %v746
  %v748 = vrot.slane %v719, 4
  %v749 = vsel %vm136, %v748, %v707
  %v750 = vrot.slane %v707, 4
  %v751 = vsel %vm136, %v719, %v750
  %v753 = vunpack.c.l.s4 1934713408
  %v754 = vunpack.c.0.s8 %v753
  %v755 = vperm.slane %v749, %v754
  %v757 = vunpack.c.l.s4 1934713408
  %v758 = vunpack.c.0.s8 %v757
  %v759 = vperm.slane %v751, %v758
  %v760 = vrot.slane %v723, 4
  %v761 = vsel %vm136, %v760, %v711
  %v762 = vrot.slane %v711, 4
  %v763 = vsel %vm136, %v723, %v762
  %v765 = vunpack.c.l.s4 1934713408
  %v766 = vunpack.c.0.s8 %v765
  %v767 = vperm.slane %v761, %v766
  %v769 = vunpack.c.l.s4 1934713408
  %v770 = vunpack.c.0.s8 %v769
  %v771 = vperm.slane %v763, %v770
  %v772 = vrot.slane %v755, 4
  %v773 = vsel %vm136, %v772, %v731
  %v774 = vrot.slane %v731, 4
  %v775 = vsel %vm136, %v755, %v774
  %v776 = vrot.slane %v759, 4
  %v777 = vsel %vm136, %v776, %v735
  %v778 = vrot.slane %v735, 4
  %v779 = vsel %vm136, %v759, %v778
  %v780 = vrot.slane %v767, 4
  %v781 = vsel %vm136, %v780, %v743
  %v782 = vrot.slane %v743, 4
  %v783 = vsel %vm136, %v767, %v782
  %v784 = vrot.slane %v771, 4
  %v785 = vsel %vm136, %v784, %v747
  %v786 = vrot.slane %v747, 4
  %v787 = vsel %vm136, %v771, %v786
  %v788 = vrot.slane %v643, 4
  %v789 = vsel %vm136, %v788, %v89
  %v790 = vrot.slane %v89, 4
  %v791 = vsel %vm136, %v643, %v790
  %v793 = vunpack.c.l.s4 1983009808
  %v794 = vunpack.c.0.s8 %v793
  %v795 = vperm.slane %v789, %v794
  %v797 = vunpack.c.l.s4 1983009808
  %v798 = vunpack.c.0.s8 %v797
  %v799 = vperm.slane %v791, %v798
  %v800 = vrot.slane %v649, 4
  %v801 = vsel %vm136, %v800, %v637
  %v802 = vrot.slane %v637, 4
  %v803 = vsel %vm136, %v649, %v802
  %v805 = vunpack.c.l.s4 1983009808
  %v806 = vunpack.c.0.s8 %v805
  %v807 = vperm.slane %v801, %v806
  %v809 = vunpack.c.l.s4 1983009808
  %v810 = vunpack.c.0.s8 %v809
  %v811 = vperm.slane %v803, %v810
  %v812 = vrot.slane %v667, 4
  %v813 = vsel %vm136, %v812, %v655
  %v814 = vrot.slane %v655, 4
  %v815 = vsel %vm136, %v667, %v814
  %v817 = vunpack.c.l.s4 1983009808
  %v818 = vunpack.c.0.s8 %v817
  %v819 = vperm.slane %v813, %v818
  %v821 = vunpack.c.l.s4 1983009808
  %v822 = vunpack.c.0.s8 %v821
  %v823 = vperm.slane %v815, %v822
  %v824 = vrot.slane %v673, 4
  %v825 = vsel %vm136, %v824, %v661
  %v826 = vrot.slane %v661, 4
  %v827 = vsel %vm136, %v673, %v826
  %v829 = vunpack.c.l.s4 1983009808
  %v830 = vunpack.c.0.s8 %v829
  %v831 = vperm.slane %v825, %v830
  %v833 = vunpack.c.l.s4 1983009808
  %v834 = vunpack.c.0.s8 %v833
  %v835 = vperm.slane %v827, %v834
  %v836 = vrot.slane %v807, 4
  %v837 = vsel %vm136, %v836, %v795
  %v838 = vrot.slane %v795, 4
  %v839 = vsel %vm136, %v807, %v838
  %v841 = vunpack.c.l.s4 1934713408
  %v842 = vunpack.c.0.s8 %v841
  %v843 = vperm.slane %v837, %v842
  %v845 = vunpack.c.l.s4 1934713408
  %v846 = vunpack.c.0.s8 %v845
  %v847 = vperm.slane %v839, %v846
  %v848 = vrot.slane %v811, 4
  %v849 = vsel %vm136, %v848, %v799
  %v850 = vrot.slane %v799, 4
  %v851 = vsel %vm136, %v811, %v850
  %v853 = vunpack.c.l.s4 1934713408
  %v854 = vunpack.c.0.s8 %v853
  %v855 = vperm.slane %v849, %v854
  %v857 = vunpack.c.l.s4 1934713408
  %v858 = vunpack.c.0.s8 %v857
  %v859 = vperm.slane %v851, %v858
  %v860 = vrot.slane %v831, 4
  %v861 = vsel %vm136, %v860, %v819
  %v862 = vrot.slane %v819, 4
  %v863 = vsel %vm136, %v831, %v862
  %v865 = vunpack.c.l.s4 1934713408
  %v866 = vunpack.c.0.s8 %v865
  %v867 = vperm.slane %v861, %v866
  %v869 = vunpack.c.l.s4 1934713408
  %v870 = vunpack.c.0.s8 %v869
  %v871 = vperm.slane %v863, %v870
  %v872 = vrot.slane %v835, 4
  %v873 = vsel %vm136, %v872, %v823
  %v874 = vrot.slane %v823, 4
  %v875 = vsel %vm136, %v835, %v874
  %v877 = vunpack.c.l.s4 1934713408
  %v878 = vunpack.c.0.s8 %v877
  %v879 = vperm.slane %v873, %v878
  %v881 = vunpack.c.l.s4 1934713408
  %v882 = vunpack.c.0.s8 %v881
  %v883 = vperm.slane %v875, %v882
  %v884 = vrot.slane %v867, 4
  %v885 = vsel %vm136, %v884, %v843
  %v886 = vrot.slane %v843, 4
  %v887 = vsel %vm136, %v867, %v886
  %v888 = vrot.slane %v871, 4
  %v889 = vsel %vm136, %v888, %v847
  %v890 = vrot.slane %v847, 4
  %v891 = vsel %vm136, %v871, %v890
  %v892 = vrot.slane %v879, 4
  %v893 = vsel %vm136, %v892, %v855
  %v894 = vrot.slane %v855, 4
  %v895 = vsel %vm136, %v879, %v894
  %v896 = vrot.slane %v883, 4
  %v897 = vsel %vm136, %v896, %v859
  %v898 = vrot.slane %v859, 4
  %v899 = vsel %vm136, %v883, %v898
  %vm900 = vcmask 64512
  %v902 = vsel %vm900, %v233, 0
  %v905 = vsel %vm900, %v505, 0
  %907 = vmatpush.xpose.msra.mxu0 0.0
  %908 = vmatpush.xpose.msra.mxu0 0.0
  %909 = vmatpush.xpose.msra.mxu0 0.0
  %910 = vmatpush.xpose.msra.mxu0 0.0
  %911 = vmatpush.xpose.msra.mxu0 0.0
  %912 = vmatpush.xpose.msra.mxu0 0.0
  %913 = vmatpush.xpose.msra.mxu0 0.0
  %914 = vmatpush.xpose.msra.mxu0 0.0
  %915 = vmatpush.xpose.msra.mxu0 0.0
  %916 = vmatpush.xpose.msra.mxu0 0.0
  %917 = vmatpush.xpose.msra.mxu0 0.0
  %918 = vmatpush.xpose.msra.mxu0 0.0
  %919 = vmatpush.xpose.msra.mxu0 0.0
  %920 = vmatpush.xpose.msra.mxu0 0.0
  %921 = vmatpush.xpose.msra.mxu0 0.0
  %922 = vmatpush.xpose.msra.mxu0 %v905
  %923 = vmatmul.f32.gmra.mxu0 %v902
  %v924 = vpop.f32.mrf.mxu0
  %v925 = vadd.f32 0.0, %v924
  %926 = vdwg.mxu0
  %v928 = vsel %vm900, %v235, 0
  %v931 = vsel %vm900, %v507, 0
  %933 = vmatpush.xpose.msra.mxu0 0.0
  %934 = vmatpush.xpose.msra.mxu0 0.0
  %935 = vmatpush.xpose.msra.mxu0 0.0
  %936 = vmatpush.xpose.msra.mxu0 0.0
  %937 = vmatpush.xpose.msra.mxu0 0.0
  %938 = vmatpush.xpose.msra.mxu0 0.0
  %939 = vmatpush.xpose.msra.mxu0 0.0
  %940 = vmatpush.xpose.msra.mxu0 0.0
  %941 = vmatpush.xpose.msra.mxu0 0.0
  %942 = vmatpush.xpose.msra.mxu0 0.0
  %943 = vmatpush.xpose.msra.mxu0 0.0
  %944 = vmatpush.xpose.msra.mxu0 0.0
  %945 = vmatpush.xpose.msra.mxu0 0.0
  %946 = vmatpush.xpose.msra.mxu0 0.0
  %947 = vmatpush.xpose.msra.mxu0 0.0
  %948 = vmatpush.xpose.msra.mxu0 %v931
  %949 = vmatmul.f32.gmra.mxu0 %v928
  %v950 = vpop.f32.mrf.mxu0
  %v951 = vadd.f32 0.0, %v950
  %952 = vdwg.mxu0
  %v954 = vsel %vm900, %v237, 0
  %v957 = vsel %vm900, %v509, 0
  %959 = vmatpush.xpose.msra.mxu0 0.0
  %960 = vmatpush.xpose.msra.mxu0 0.0
  %961 = vmatpush.xpose.msra.mxu0 0.0
  %962 = vmatpush.xpose.msra.mxu0 0.0
  %963 = vmatpush.xpose.msra.mxu0 0.0
  %964 = vmatpush.xpose.msra.mxu0 0.0
  %965 = vmatpush.xpose.msra.mxu0 0.0
  %966 = vmatpush.xpose.msra.mxu0 0.0
  %967 = vmatpush.xpose.msra.mxu0 0.0
  %968 = vmatpush.xpose.msra.mxu0 0.0
  %969 = vmatpush.xpose.msra.mxu0 0.0
  %970 = vmatpush.xpose.msra.mxu0 0.0
  %971 = vmatpush.xpose.msra.mxu0 0.0
  %972 = vmatpush.xpose.msra.mxu0 0.0
  %973 = vmatpush.xpose.msra.mxu0 0.0
  %974 = vmatpush.xpose.msra.mxu0 %v957
  %975 = vmatmul.f32.gmra.mxu0 %v954
  %v976 = vpop.f32.mrf.mxu0
  %v977 = vadd.f32 0.0, %v976
  %978 = vdwg.mxu0
  %v980 = vsel %vm900, %v239, 0
  %v983 = vsel %vm900, %v511, 0
  %985 = vmatpush.xpose.msra.mxu0 0.0
  %986 = vmatpush.xpose.msra.mxu0 0.0
  %987 = vmatpush.xpose.msra.mxu0 0.0
  %988 = vmatpush.xpose.msra.mxu0 0.0
  %989 = vmatpush.xpose.msra.mxu0 0.0
  %990 = vmatpush.xpose.msra.mxu0 0.0
  %991 = vmatpush.xpose.msra.mxu0 0.0
  %992 = vmatpush.xpose.msra.mxu0 0.0
  %993 = vmatpush.xpose.msra.mxu0 0.0
  %994 = vmatpush.xpose.msra.mxu0 0.0
  %995 = vmatpush.xpose.msra.mxu0 0.0
  %996 = vmatpush.xpose.msra.mxu0 0.0
  %997 = vmatpush.xpose.msra.mxu0 0.0
  %998 = vmatpush.xpose.msra.mxu0 0.0
  %999 = vmatpush.xpose.msra.mxu0 0.0
  %1000 = vmatpush.xpose.msra.mxu0 %v983
  %1001 = vmatmul.f32.gmra.mxu0 %v980
  %v1002 = vpop.f32.mrf.mxu0
  %v1003 = vadd.f32 0.0, %v1002
  %1004 = vdwg.mxu0
  %v1006 = vsel %vm900, %v241, 0
  %v1009 = vsel %vm900, %v513, 0
  %1011 = vmatpush.xpose.msra.mxu0 0.0
  %1012 = vmatpush.xpose.msra.mxu0 0.0
  %1013 = vmatpush.xpose.msra.mxu0 0.0
  %1014 = vmatpush.xpose.msra.mxu0 0.0
  %1015 = vmatpush.xpose.msra.mxu0 0.0
  %1016 = vmatpush.xpose.msra.mxu0 0.0
  %1017 = vmatpush.xpose.msra.mxu0 0.0
  %1018 = vmatpush.xpose.msra.mxu0 0.0
  %1019 = vmatpush.xpose.msra.mxu0 0.0
  %1020 = vmatpush.xpose.msra.mxu0 0.0
  %1021 = vmatpush.xpose.msra.mxu0 0.0
  %1022 = vmatpush.xpose.msra.mxu0 0.0
  %1023 = vmatpush.xpose.msra.mxu0 0.0
  %1024 = vmatpush.xpose.msra.mxu0 0.0
  %1025 = vmatpush.xpose.msra.mxu0 0.0
  %1026 = vmatpush.xpose.msra.mxu0 %v1009
  %1027 = vmatmul.f32.gmra.mxu0 %v1006
  %v1028 = vpop.f32.mrf.mxu0
  %v1029 = vadd.f32 0.0, %v1028
  %1030 = vdwg.mxu0
  %v1032 = vsel %vm900, %v243, 0
  %v1035 = vsel %vm900, %v515, 0
  %1037 = vmatpush.xpose.msra.mxu0 0.0
  %1038 = vmatpush.xpose.msra.mxu0 0.0
  %1039 = vmatpush.xpose.msra.mxu0 0.0
  %1040 = vmatpush.xpose.msra.mxu0 0.0
  %1041 = vmatpush.xpose.msra.mxu0 0.0
  %1042 = vmatpush.xpose.msra.mxu0 0.0
  %1043 = vmatpush.xpose.msra.mxu0 0.0
  %1044 = vmatpush.xpose.msra.mxu0 0.0
  %1045 = vmatpush.xpose.msra.mxu0 0.0
  %1046 = vmatpush.xpose.msra.mxu0 0.0
  %1047 = vmatpush.xpose.msra.mxu0 0.0
  %1048 = vmatpush.xpose.msra.mxu0 0.0
  %1049 = vmatpush.xpose.msra.mxu0 0.0
  %1050 = vmatpush.xpose.msra.mxu0 0.0
  %1051 = vmatpush.xpose.msra.mxu0 0.0
  %1052 = vmatpush.xpose.msra.mxu0 %v1035
  %1053 = vmatmul.f32.gmra.mxu0 %v1032
  %v1054 = vpop.f32.mrf.mxu0
  %v1055 = vadd.f32 0.0, %v1054
  %1056 = vdwg.mxu0
  %v1058 = vsel %vm900, %v245, 0
  %v1061 = vsel %vm900, %v517, 0
  %1063 = vmatpush.xpose.msra.mxu0 0.0
  %1064 = vmatpush.xpose.msra.mxu0 0.0
  %1065 = vmatpush.xpose.msra.mxu0 0.0
  %1066 = vmatpush.xpose.msra.mxu0 0.0
  %1067 = vmatpush.xpose.msra.mxu0 0.0
  %1068 = vmatpush.xpose.msra.mxu0 0.0
  %1069 = vmatpush.xpose.msra.mxu0 0.0
  %1070 = vmatpush.xpose.msra.mxu0 0.0
  %1071 = vmatpush.xpose.msra.mxu0 0.0
  %1072 = vmatpush.xpose.msra.mxu0 0.0
  %1073 = vmatpush.xpose.msra.mxu0 0.0
  %1074 = vmatpush.xpose.msra.mxu0 0.0
  %1075 = vmatpush.xpose.msra.mxu0 0.0
  %1076 = vmatpush.xpose.msra.mxu0 0.0
  %1077 = vmatpush.xpose.msra.mxu0 0.0
  %1078 = vmatpush.xpose.msra.mxu0 %v1061
  %1079 = vmatmul.f32.gmra.mxu0 %v1058
  %v1080 = vpop.f32.mrf.mxu0
  %v1081 = vadd.f32 0.0, %v1080
  %1082 = vdwg.mxu0
  %v1084 = vsel %vm900, %v247, 0
  %v1087 = vsel %vm900, %v519, 0
  %1089 = vmatpush.xpose.msra.mxu0 0.0
  %1090 = vmatpush.xpose.msra.mxu0 0.0
  %1091 = vmatpush.xpose.msra.mxu0 0.0
  %1092 = vmatpush.xpose.msra.mxu0 0.0
  %1093 = vmatpush.xpose.msra.mxu0 0.0
  %1094 = vmatpush.xpose.msra.mxu0 0.0
  %1095 = vmatpush.xpose.msra.mxu0 0.0
  %1096 = vmatpush.xpose.msra.mxu0 0.0
  %1097 = vmatpush.xpose.msra.mxu0 0.0
  %1098 = vmatpush.xpose.msra.mxu0 0.0
  %1099 = vmatpush.xpose.msra.mxu0 0.0
  %1100 = vmatpush.xpose.msra.mxu0 0.0
  %1101 = vmatpush.xpose.msra.mxu0 0.0
  %1102 = vmatpush.xpose.msra.mxu0 0.0
  %1103 = vmatpush.xpose.msra.mxu0 0.0
  %1104 = vmatpush.xpose.msra.mxu0 %v1087
  %1105 = vmatmul.f32.gmra.mxu0 %v1084
  %v1106 = vpop.f32.mrf.mxu0
  %v1107 = vadd.f32 0.0, %v1106
  %1108 = vdwg.mxu0
  %v1110 = vsel %vm900, %v345, 0
  %v1113 = vsel %vm900, %v617, 0
  %1115 = vmatpush.xpose.msra.mxu0 0.0
  %1116 = vmatpush.xpose.msra.mxu0 0.0
  %1117 = vmatpush.xpose.msra.mxu0 0.0
  %1118 = vmatpush.xpose.msra.mxu0 0.0
  %1119 = vmatpush.xpose.msra.mxu0 0.0
  %1120 = vmatpush.xpose.msra.mxu0 0.0
  %1121 = vmatpush.xpose.msra.mxu0 0.0
  %1122 = vmatpush.xpose.msra.mxu0 0.0
  %1123 = vmatpush.xpose.msra.mxu0 0.0
  %1124 = vmatpush.xpose.msra.mxu0 0.0
  %1125 = vmatpush.xpose.msra.mxu0 0.0
  %1126 = vmatpush.xpose.msra.mxu0 0.0
  %1127 = vmatpush.xpose.msra.mxu0 0.0
  %1128 = vmatpush.xpose.msra.mxu0 0.0
  %1129 = vmatpush.xpose.msra.mxu0 0.0
  %1130 = vmatpush.xpose.msra.mxu0 %v1113
  %1131 = vmatmul.f32.gmra.mxu0 %v1110
  %v1132 = vpop.f32.mrf.mxu0
  %v1133 = vadd.f32 0.0, %v1132
  %1134 = vdwg.mxu0
  %v1136 = vsel %vm900, %v347, 0
  %v1139 = vsel %vm900, %v619, 0
  %1141 = vmatpush.xpose.msra.mxu0 0.0
  %1142 = vmatpush.xpose.msra.mxu0 0.0
  %1143 = vmatpush.xpose.msra.mxu0 0.0
  %1144 = vmatpush.xpose.msra.mxu0 0.0
  %1145 = vmatpush.xpose.msra.mxu0 0.0
  %1146 = vmatpush.xpose.msra.mxu0 0.0
  %1147 = vmatpush.xpose.msra.mxu0 0.0
  %1148 = vmatpush.xpose.msra.mxu0 0.0
  %1149 = vmatpush.xpose.msra.mxu0 0.0
  %1150 = vmatpush.xpose.msra.mxu0 0.0
  %1151 = vmatpush.xpose.msra.mxu0 0.0
  %1152 = vmatpush.xpose.msra.mxu0 0.0
  %1153 = vmatpush.xpose.msra.mxu0 0.0
  %1154 = vmatpush.xpose.msra.mxu0 0.0
  %1155 = vmatpush.xpose.msra.mxu0 0.0
  %1156 = vmatpush.xpose.msra.mxu0 %v1139
  %1157 = vmatmul.f32.gmra.mxu0 %v1136
  %v1158 = vpop.f32.mrf.mxu0
  %v1159 = vadd.f32 0.0, %v1158
  %1160 = vdwg.mxu0
  %v1162 = vsel %vm900, %v349, 0
  %v1165 = vsel %vm900, %v621, 0
  %1167 = vmatpush.xpose.msra.mxu0 0.0
  %1168 = vmatpush.xpose.msra.mxu0 0.0
  %1169 = vmatpush.xpose.msra.mxu0 0.0
  %1170 = vmatpush.xpose.msra.mxu0 0.0
  %1171 = vmatpush.xpose.msra.mxu0 0.0
  %1172 = vmatpush.xpose.msra.mxu0 0.0
  %1173 = vmatpush.xpose.msra.mxu0 0.0
  %1174 = vmatpush.xpose.msra.mxu0 0.0
  %1175 = vmatpush.xpose.msra.mxu0 0.0
  %1176 = vmatpush.xpose.msra.mxu0 0.0
  %1177 = vmatpush.xpose.msra.mxu0 0.0
  %1178 = vmatpush.xpose.msra.mxu0 0.0
  %1179 = vmatpush.xpose.msra.mxu0 0.0
  %1180 = vmatpush.xpose.msra.mxu0 0.0
  %1181 = vmatpush.xpose.msra.mxu0 0.0
  %1182 = vmatpush.xpose.msra.mxu0 %v1165
  %1183 = vmatmul.f32.gmra.mxu0 %v1162
  %v1184 = vpop.f32.mrf.mxu0
  %v1185 = vadd.f32 0.0, %v1184
  %1186 = vdwg.mxu0
  %v1188 = vsel %vm900, %v351, 0
  %v1191 = vsel %vm900, %v623, 0
  %1193 = vmatpush.xpose.msra.mxu0 0.0
  %1194 = vmatpush.xpose.msra.mxu0 0.0
  %1195 = vmatpush.xpose.msra.mxu0 0.0
  %1196 = vmatpush.xpose.msra.mxu0 0.0
  %1197 = vmatpush.xpose.msra.mxu0 0.0
  %1198 = vmatpush.xpose.msra.mxu0 0.0
  %1199 = vmatpush.xpose.msra.mxu0 0.0
  %1200 = vmatpush.xpose.msra.mxu0 0.0
  %1201 = vmatpush.xpose.msra.mxu0 0.0
  %1202 = vmatpush.xpose.msra.mxu0 0.0
  %1203 = vmatpush.xpose.msra.mxu0 0.0
  %1204 = vmatpush.xpose.msra.mxu0 0.0
  %1205 = vmatpush.xpose.msra.mxu0 0.0
  %1206 = vmatpush.xpose.msra.mxu0 0.0
  %1207 = vmatpush.xpose.msra.mxu0 0.0
  %1208 = vmatpush.xpose.msra.mxu0 %v1191
  %1209 = vmatmul.f32.gmra.mxu0 %v1188
  %v1210 = vpop.f32.mrf.mxu0
  %v1211 = vadd.f32 0.0, %v1210
  %1212 = vdwg.mxu0
  %v1214 = vsel %vm900, %v353, 0
  %v1217 = vsel %vm900, %v625, 0
  %1219 = vmatpush.xpose.msra.mxu0 0.0
  %1220 = vmatpush.xpose.msra.mxu0 0.0
  %1221 = vmatpush.xpose.msra.mxu0 0.0
  %1222 = vmatpush.xpose.msra.mxu0 0.0
  %1223 = vmatpush.xpose.msra.mxu0 0.0
  %1224 = vmatpush.xpose.msra.mxu0 0.0
  %1225 = vmatpush.xpose.msra.mxu0 0.0
  %1226 = vmatpush.xpose.msra.mxu0 0.0
  %1227 = vmatpush.xpose.msra.mxu0 0.0
  %1228 = vmatpush.xpose.msra.mxu0 0.0
  %1229 = vmatpush.xpose.msra.mxu0 0.0
  %1230 = vmatpush.xpose.msra.mxu0 0.0
  %1231 = vmatpush.xpose.msra.mxu0 0.0
  %1232 = vmatpush.xpose.msra.mxu0 0.0
  %1233 = vmatpush.xpose.msra.mxu0 0.0
  %1234 = vmatpush.xpose.msra.mxu0 %v1217
  %1235 = vmatmul.f32.gmra.mxu0 %v1214
  %v1236 = vpop.f32.mrf.mxu0
  %v1237 = vadd.f32 0.0, %v1236
  %1238 = vdwg.mxu0
  %v1240 = vsel %vm900, %v355, 0
  %v1243 = vsel %vm900, %v627, 0
  %1245 = vmatpush.xpose.msra.mxu0 0.0
  %1246 = vmatpush.xpose.msra.mxu0 0.0
  %1247 = vmatpush.xpose.msra.mxu0 0.0
  %1248 = vmatpush.xpose.msra.mxu0 0.0
  %1249 = vmatpush.xpose.msra.mxu0 0.0
  %1250 = vmatpush.xpose.msra.mxu0 0.0
  %1251 = vmatpush.xpose.msra.mxu0 0.0
  %1252 = vmatpush.xpose.msra.mxu0 0.0
  %1253 = vmatpush.xpose.msra.mxu0 0.0
  %1254 = vmatpush.xpose.msra.mxu0 0.0
  %1255 = vmatpush.xpose.msra.mxu0 0.0
  %1256 = vmatpush.xpose.msra.mxu0 0.0
  %1257 = vmatpush.xpose.msra.mxu0 0.0
  %1258 = vmatpush.xpose.msra.mxu0 0.0
  %1259 = vmatpush.xpose.msra.mxu0 0.0
  %1260 = vmatpush.xpose.msra.mxu0 %v1243
  %1261 = vmatmul.f32.gmra.mxu0 %v1240
  %v1262 = vpop.f32.mrf.mxu0
  %v1263 = vadd.f32 0.0, %v1262
  %1264 = vdwg.mxu0
  %v1266 = vsel %vm900, %v357, 0
  %v1269 = vsel %vm900, %v629, 0
  %1271 = vmatpush.xpose.msra.mxu0 0.0
  %1272 = vmatpush.xpose.msra.mxu0 0.0
  %1273 = vmatpush.xpose.msra.mxu0 0.0
  %1274 = vmatpush.xpose.msra.mxu0 0.0
  %1275 = vmatpush.xpose.msra.mxu0 0.0
  %1276 = vmatpush.xpose.msra.mxu0 0.0
  %1277 = vmatpush.xpose.msra.mxu0 0.0
  %1278 = vmatpush.xpose.msra.mxu0 0.0
  %1279 = vmatpush.xpose.msra.mxu0 0.0
  %1280 = vmatpush.xpose.msra.mxu0 0.0
  %1281 = vmatpush.xpose.msra.mxu0 0.0
  %1282 = vmatpush.xpose.msra.mxu0 0.0
  %1283 = vmatpush.xpose.msra.mxu0 0.0
  %1284 = vmatpush.xpose.msra.mxu0 0.0
  %1285 = vmatpush.xpose.msra.mxu0 0.0
  %1286 = vmatpush.xpose.msra.mxu0 %v1269
  %1287 = vmatmul.f32.gmra.mxu0 %v1266
  %v1288 = vpop.f32.mrf.mxu0
  %v1289 = vadd.f32 0.0, %v1288
  %1290 = vdwg.mxu0
  %v1292 = vsel %vm900, %v359, 0
  %v1295 = vsel %vm900, %v631, 0
  %1297 = vmatpush.xpose.msra.mxu0 0.0
  %1298 = vmatpush.xpose.msra.mxu0 0.0
  %1299 = vmatpush.xpose.msra.mxu0 0.0
  %1300 = vmatpush.xpose.msra.mxu0 0.0
  %1301 = vmatpush.xpose.msra.mxu0 0.0
  %1302 = vmatpush.xpose.msra.mxu0 0.0
  %1303 = vmatpush.xpose.msra.mxu0 0.0
  %1304 = vmatpush.xpose.msra.mxu0 0.0
  %1305 = vmatpush.xpose.msra.mxu0 0.0
  %1306 = vmatpush.xpose.msra.mxu0 0.0
  %1307 = vmatpush.xpose.msra.mxu0 0.0
  %1308 = vmatpush.xpose.msra.mxu0 0.0
  %1309 = vmatpush.xpose.msra.mxu0 0.0
  %1310 = vmatpush.xpose.msra.mxu0 0.0
  %1311 = vmatpush.xpose.msra.mxu0 0.0
  %1312 = vmatpush.xpose.msra.mxu0 %v1295
  %1313 = vmatmul.f32.gmra.mxu0 %v1292
  %v1314 = vpop.f32.mrf.mxu0
  %v1315 = vadd.f32 0.0, %v1314
  %1316 = vdwg.mxu0
  %v1317 = vrcp.pop 2.828427
  %v1318 = vmul.f32 2.828427, %v1317
  %v1319 = vsub.f32 1.0, %v1318
  %v1320 = vmul.f32 %v1317, %v1319
  %v1321 = vadd.f32 %v1317, %v1320
  %vm1322 = vweird.f32 %v1317
  %v1323 = vsel %vm1322, %v1317, %v1321
  %v1324 = vmul.f32 %v925, %v1323
  %v1325 = vmul.f32 %v951, %v1323
  %v1326 = vmul.f32 %v977, %v1323
  %v1327 = vmul.f32 %v1003, %v1323
  %v1328 = vmul.f32 %v1029, %v1323
  %v1329 = vmul.f32 %v1055, %v1323
  %v1330 = vmul.f32 %v1081, %v1323
  %v1331 = vmul.f32 %v1107, %v1323
  %v1332 = vmul.f32 %v1133, %v1323
  %v1333 = vmul.f32 %v1159, %v1323
  %v1334 = vmul.f32 %v1185, %v1323
  %v1335 = vmul.f32 %v1211, %v1323
  %v1336 = vmul.f32 %v1237, %v1323
  %v1337 = vmul.f32 %v1263, %v1323
  %v1338 = vmul.f32 %v1289, %v1323
  %v1339 = vmul.f32 %v1315, %v1323
  %v1340 = vsel %vm900, %v1324, -inf
  %1341 = vmax.xlane.f32.xlu0 %v1340
  %v1342 = vpop.xlane.xlu0 %1341
  %v1343 = vsel %vm900, %v1325, -inf
  %1344 = vmax.xlane.f32.xlu0 %v1343
  %v1345 = vpop.xlane.xlu0 %1344
  %v1346 = vsel %vm900, %v1326, -inf
  %1347 = vmax.xlane.f32.xlu0 %v1346
  %v1348 = vpop.xlane.xlu0 %1347
  %v1349 = vsel %vm900, %v1327, -inf
  %1350 = vmax.xlane.f32.xlu0 %v1349
  %v1351 = vpop.xlane.xlu0 %1350
  %v1352 = vsel %vm900, %v1328, -inf
  %1353 = vmax.xlane.f32.xlu0 %v1352
  %v1354 = vpop.xlane.xlu0 %1353
  %v1355 = vsel %vm900, %v1329, -inf
  %1356 = vmax.xlane.f32.xlu0 %v1355
  %v1357 = vpop.xlane.xlu0 %1356
  %v1358 = vsel %vm900, %v1330, -inf
  %1359 = vmax.xlane.f32.xlu0 %v1358
  %v1360 = vpop.xlane.xlu0 %1359
  %v1361 = vsel %vm900, %v1331, -inf
  %1362 = vmax.xlane.f32.xlu0 %v1361
  %v1363 = vpop.xlane.xlu0 %1362
  %v1364 = vsel %vm900, %v1332, -inf
  %1365 = vmax.xlane.f32.xlu0 %v1364
  %v1366 = vpop.xlane.xlu0 %1365
  %v1367 = vsel %vm900, %v1333, -inf
  %1368 = vmax.xlane.f32.xlu0 %v1367
  %v1369 = vpop.xlane.xlu0 %1368
  %v1370 = vsel %vm900, %v1334, -inf
  %1371 = vmax.xlane.f32.xlu0 %v1370
  %v1372 = vpop.xlane.xlu0 %1371
  %v1373 = vsel %vm900, %v1335, -inf
  %1374 = vmax.xlane.f32.xlu0 %v1373
  %v1375 = vpop.xlane.xlu0 %1374
  %v1376 = vsel %vm900, %v1336, -inf
  %1377 = vmax.xlane.f32.xlu0 %v1376
  %v1378 = vpop.xlane.xlu0 %1377
  %v1379 = vsel %vm900, %v1337, -inf
  %1380 = vmax.xlane.f32.xlu0 %v1379
  %v1381 = vpop.xlane.xlu0 %1380
  %v1382 = vsel %vm900, %v1338, -inf
  %1383 = vmax.xlane.f32.xlu0 %v1382
  %v1384 = vpop.xlane.xlu0 %1383
  %v1385 = vsel %vm900, %v1339, -inf
  %1386 = vmax.xlane.f32.xlu0 %v1385
  %v1387 = vpop.xlane.xlu0 %1386
  %v1388 = vsub.f32 %v1324, %v1342
  %v1389 = vsub.f32 %v1325, %v1345
  %v1390 = vsub.f32 %v1326, %v1348
  %v1391 = vsub.f32 %v1327, %v1351
  %v1392 = vsub.f32 %v1328, %v1354
  %v1393 = vsub.f32 %v1329, %v1357
  %v1394 = vsub.f32 %v1330, %v1360
  %v1395 = vsub.f32 %v1331, %v1363
  %v1396 = vsub.f32 %v1332, %v1366
  %v1397 = vsub.f32 %v1333, %v1369
  %v1398 = vsub.f32 %v1334, %v1372
  %v1399 = vsub.f32 %v1335, %v1375
  %v1400 = vsub.f32 %v1336, %v1378
  %v1401 = vsub.f32 %v1337, %v1381
  %v1402 = vsub.f32 %v1338, %v1384
  %v1403 = vsub.f32 %v1339, %v1387
  %v1404 = vmul.f32 %v1388, 1.442695
  %v1405 = vpow.pop %v1404
  %v1406 = vmul.f32 %v1389, 1.442695
  %v1407 = vpow.pop %v1406
  %v1408 = vmul.f32 %v1390, 1.442695
  %v1409 = vpow.pop %v1408
  %v1410 = vmul.f32 %v1391, 1.442695
  %v1411 = vpow.pop %v1410
  %v1412 = vmul.f32 %v1392, 1.442695
  %v1413 = vpow.pop %v1412
  %v1414 = vmul.f32 %v1393, 1.442695
  %v1415 = vpow.pop %v1414
  %v1416 = vmul.f32 %v1394, 1.442695
  %v1417 = vpow.pop %v1416
  %v1418 = vmul.f32 %v1395, 1.442695
  %v1419 = vpow.pop %v1418
  %v1420 = vmul.f32 %v1396, 1.442695
  %v1421 = vpow.pop %v1420
  %v1422 = vmul.f32 %v1397, 1.442695
  %v1423 = vpow.pop %v1422
  %v1424 = vmul.f32 %v1398, 1.442695
  %v1425 = vpow.pop %v1424
  %v1426 = vmul.f32 %v1399, 1.442695
  %v1427 = vpow.pop %v1426
  %v1428 = vmul.f32 %v1400, 1.442695
  %v1429 = vpow.pop %v1428
  %v1430 = vmul.f32 %v1401, 1.442695
  %v1431 = vpow.pop %v1430
  %v1432 = vmul.f32 %v1402, 1.442695
  %v1433 = vpow.pop %v1432
  %v1434 = vmul.f32 %v1403, 1.442695
  %v1435 = vpow.pop %v1434
  %v1436 = vsel %vm900, %v1405, 0.0
  %1437 = vadd.xlane.f32.xlu0 %v1436
  %v1438 = vpop.xlane.xlu0 %1437
  %v1439 = vsel %vm900, %v1407, 0.0
  %1440 = vadd.xlane.f32.xlu0 %v1439
  %v1441 = vpop.xlane.xlu0 %1440
  %v1442 = vsel %vm900, %v1409, 0.0
  %1443 = vadd.xlane.f32.xlu0 %v1442
  %v1444 = vpop.xlane.xlu0 %1443
  %v1445 = vsel %vm900, %v1411, 0.0
  %1446 = vadd.xlane.f32.xlu0 %v1445
  %v1447 = vpop.xlane.xlu0 %1446
  %v1448 = vsel %vm900, %v1413, 0.0
  %1449 = vadd.xlane.f32.xlu0 %v1448
  %v1450 = vpop.xlane.xlu0 %1449
  %v1451 = vsel %vm900, %v1415, 0.0
  %1452 = vadd.xlane.f32.xlu0 %v1451
  %v1453 = vpop.xlane.xlu0 %1452
  %v1454 = vsel %vm900, %v1417, 0.0
  %1455 = vadd.xlane.f32.xlu0 %v1454
  %v1456 = vpop.xlane.xlu0 %1455
  %v1457 = vsel %vm900, %v1419, 0.0
  %1458 = vadd.xlane.f32.xlu0 %v1457
  %v1459 = vpop.xlane.xlu0 %1458
  %v1460 = vsel %vm900, %v1421, 0.0
  %1461 = vadd.xlane.f32.xlu0 %v1460
  %v1462 = vpop.xlane.xlu0 %1461
  %v1463 = vsel %vm900, %v1423, 0.0
  %1464 = vadd.xlane.f32.xlu0 %v1463
  %v1465 = vpop.xlane.xlu0 %1464
  %v1466 = vsel %vm900, %v1425, 0.0
  %1467 = vadd.xlane.f32.xlu0 %v1466
  %v1468 = vpop.xlane.xlu0 %1467
  %v1469 = vsel %vm900, %v1427, 0.0
  %1470 = vadd.xlane.f32.xlu0 %v1469
  %v1471 = vpop.xlane.xlu0 %1470
  %v1472 = vsel %vm900, %v1429, 0.0
  %1473 = vadd.xlane.f32.xlu0 %v1472
  %v1474 = vpop.xlane.xlu0 %1473
  %v1475 = vsel %vm900, %v1431, 0.0
  %1476 = vadd.xlane.f32.xlu0 %v1475
  %v1477 = vpop.xlane.xlu0 %1476
  %v1478 = vsel %vm900, %v1433, 0.0
  %1479 = vadd.xlane.f32.xlu0 %v1478
  %v1480 = vpop.xlane.xlu0 %1479
  %v1481 = vsel %vm900, %v1435, 0.0
  %1482 = vadd.xlane.f32.xlu0 %v1481
  %v1483 = vpop.xlane.xlu0 %1482
  %v1484 = vrcp.pop %v1438
  %v1485 = vmul.f32 %v1438, %v1484
  %v1486 = vsub.f32 1.0, %v1485
  %v1487 = vmul.f32 %v1484, %v1486
  %v1488 = vadd.f32 %v1484, %v1487
  %vm1489 = vweird.f32 %v1438
  %vm1490 = vweird.f32 %v1484
  %vm1491 = vmor %vm1489, %vm1490
  %v1492 = vsel %vm1491, %v1484, %v1488
  %v1493 = vand.u32 2147483647, %v1438
  %vm1494 = vcmp.eq.f32.partialorder %v1493, 8.507059e+37
  %v1495 = vand.u32 %v1438, 2147483648
  %v1496 = vor.u32 1.1754944e-38, %v1495
  %v1497 = vsel %vm1494, %v1496, %v1492
  %v1498 = vmul.f32 %v1405, %v1497
  %v1499 = vrcp.pop %v1441
  %v1500 = vmul.f32 %v1441, %v1499
  %v1501 = vsub.f32 1.0, %v1500
  %v1502 = vmul.f32 %v1499, %v1501
  %v1503 = vadd.f32 %v1499, %v1502
  %vm1504 = vweird.f32 %v1441
  %vm1505 = vweird.f32 %v1499
  %vm1506 = vmor %vm1504, %vm1505
  %v1507 = vsel %vm1506, %v1499, %v1503
  %v1508 = vand.u32 2147483647, %v1441
  %vm1509 = vcmp.eq.f32.partialorder %v1508, 8.507059e+37
  %v1510 = vand.u32 %v1441, 2147483648
  %v1511 = vor.u32 1.1754944e-38, %v1510
  %v1512 = vsel %vm1509, %v1511, %v1507
  %v1513 = vmul.f32 %v1407, %v1512
  %v1514 = vrcp.pop %v1444
  %v1515 = vmul.f32 %v1444, %v1514
  %v1516 = vsub.f32 1.0, %v1515
  %v1517 = vmul.f32 %v1514, %v1516
  %v1518 = vadd.f32 %v1514, %v1517
  %vm1519 = vweird.f32 %v1444
  %vm1520 = vweird.f32 %v1514
  %vm1521 = vmor %vm1519, %vm1520
  %v1522 = vsel %vm1521, %v1514, %v1518
  %v1523 = vand.u32 2147483647, %v1444
  %vm1524 = vcmp.eq.f32.partialorder %v1523, 8.507059e+37
  %v1525 = vand.u32 %v1444, 2147483648
  %v1526 = vor.u32 1.1754944e-38, %v1525
  %v1527 = vsel %vm1524, %v1526, %v1522
  %v1528 = vmul.f32 %v1409, %v1527
  %v1529 = vrcp.pop %v1447
  %v1530 = vmul.f32 %v1447, %v1529
  %v1531 = vsub.f32 1.0, %v1530
  %v1532 = vmul.f32 %v1529, %v1531
  %v1533 = vadd.f32 %v1529, %v1532
  %vm1534 = vweird.f32 %v1447
  %vm1535 = vweird.f32 %v1529
  %vm1536 = vmor %vm1534, %vm1535
  %v1537 = vsel %vm1536, %v1529, %v1533
  %v1538 = vand.u32 2147483647, %v1447
  %vm1539 = vcmp.eq.f32.partialorder %v1538, 8.507059e+37
  %v1540 = vand.u32 %v1447, 2147483648
  %v1541 = vor.u32 1.1754944e-38, %v1540
  %v1542 = vsel %vm1539, %v1541, %v1537
  %v1543 = vmul.f32 %v1411, %v1542
  %v1544 = vrcp.pop %v1450
  %v1545 = vmul.f32 %v1450, %v1544
  %v1546 = vsub.f32 1.0, %v1545
  %v1547 = vmul.f32 %v1544, %v1546
  %v1548 = vadd.f32 %v1544, %v1547
  %vm1549 = vweird.f32 %v1450
  %vm1550 = vweird.f32 %v1544
  %vm1551 = vmor %vm1549, %vm1550
  %v1552 = vsel %vm1551, %v1544, %v1548
  %v1553 = vand.u32 2147483647, %v1450
  %vm1554 = vcmp.eq.f32.partialorder %v1553, 8.507059e+37
  %v1555 = vand.u32 %v1450, 2147483648
  %v1556 = vor.u32 1.1754944e-38, %v1555
  %v1557 = vsel %vm1554, %v1556, %v1552
  %v1558 = vmul.f32 %v1413, %v1557
  %v1559 = vrcp.pop %v1453
  %v1560 = vmul.f32 %v1453, %v1559
  %v1561 = vsub.f32 1.0, %v1560
  %v1562 = vmul.f32 %v1559, %v1561
  %v1563 = vadd.f32 %v1559, %v1562
  %vm1564 = vweird.f32 %v1453
  %vm1565 = vweird.f32 %v1559
  %vm1566 = vmor %vm1564, %vm1565
  %v1567 = vsel %vm1566, %v1559, %v1563
  %v1568 = vand.u32 2147483647, %v1453
  %vm1569 = vcmp.eq.f32.partialorder %v1568, 8.507059e+37
  %v1570 = vand.u32 %v1453, 2147483648
  %v1571 = vor.u32 1.1754944e-38, %v1570
  %v1572 = vsel %vm1569, %v1571, %v1567
  %v1573 = vmul.f32 %v1415, %v1572
  %v1574 = vrcp.pop %v1456
  %v1575 = vmul.f32 %v1456, %v1574
  %v1576 = vsub.f32 1.0, %v1575
  %v1577 = vmul.f32 %v1574, %v1576
  %v1578 = vadd.f32 %v1574, %v1577
  %vm1579 = vweird.f32 %v1456
  %vm1580 = vweird.f32 %v1574
  %vm1581 = vmor %vm1579, %vm1580
  %v1582 = vsel %vm1581, %v1574, %v1578
  %v1583 = vand.u32 2147483647, %v1456
  %vm1584 = vcmp.eq.f32.partialorder %v1583, 8.507059e+37
  %v1585 = vand.u32 %v1456, 2147483648
  %v1586 = vor.u32 1.1754944e-38, %v1585
  %v1587 = vsel %vm1584, %v1586, %v1582
  %v1588 = vmul.f32 %v1417, %v1587
  %v1589 = vrcp.pop %v1459
  %v1590 = vmul.f32 %v1459, %v1589
  %v1591 = vsub.f32 1.0, %v1590
  %v1592 = vmul.f32 %v1589, %v1591
  %v1593 = vadd.f32 %v1589, %v1592
  %vm1594 = vweird.f32 %v1459
  %vm1595 = vweird.f32 %v1589
  %vm1596 = vmor %vm1594, %vm1595
  %v1597 = vsel %vm1596, %v1589, %v1593
  %v1598 = vand.u32 2147483647, %v1459
  %vm1599 = vcmp.eq.f32.partialorder %v1598, 8.507059e+37
  %v1600 = vand.u32 %v1459, 2147483648
  %v1601 = vor.u32 1.1754944e-38, %v1600
  %v1602 = vsel %vm1599, %v1601, %v1597
  %v1603 = vmul.f32 %v1419, %v1602
  %v1604 = vrcp.pop %v1462
  %v1605 = vmul.f32 %v1462, %v1604
  %v1606 = vsub.f32 1.0, %v1605
  %v1607 = vmul.f32 %v1604, %v1606
  %v1608 = vadd.f32 %v1604, %v1607
  %vm1609 = vweird.f32 %v1462
  %vm1610 = vweird.f32 %v1604
  %vm1611 = vmor %vm1609, %vm1610
  %v1612 = vsel %vm1611, %v1604, %v1608
  %v1613 = vand.u32 2147483647, %v1462
  %vm1614 = vcmp.eq.f32.partialorder %v1613, 8.507059e+37
  %v1615 = vand.u32 %v1462, 2147483648
  %v1616 = vor.u32 1.1754944e-38, %v1615
  %v1617 = vsel %vm1614, %v1616, %v1612
  %v1618 = vmul.f32 %v1421, %v1617
  %v1619 = vrcp.pop %v1465
  %v1620 = vmul.f32 %v1465, %v1619
  %v1621 = vsub.f32 1.0, %v1620
  %v1622 = vmul.f32 %v1619, %v1621
  %v1623 = vadd.f32 %v1619, %v1622
  %vm1624 = vweird.f32 %v1465
  %vm1625 = vweird.f32 %v1619
  %vm1626 = vmor %vm1624, %vm1625
  %v1627 = vsel %vm1626, %v1619, %v1623
  %v1628 = vand.u32 2147483647, %v1465
  %vm1629 = vcmp.eq.f32.partialorder %v1628, 8.507059e+37
  %v1630 = vand.u32 %v1465, 2147483648
  %v1631 = vor.u32 1.1754944e-38, %v1630
  %v1632 = vsel %vm1629, %v1631, %v1627
  %v1633 = vmul.f32 %v1423, %v1632
  %v1634 = vrcp.pop %v1468
  %v1635 = vmul.f32 %v1468, %v1634
  %v1636 = vsub.f32 1.0, %v1635
  %v1637 = vmul.f32 %v1634, %v1636
  %v1638 = vadd.f32 %v1634, %v1637
  %vm1639 = vweird.f32 %v1468
  %vm1640 = vweird.f32 %v1634
  %vm1641 = vmor %vm1639, %vm1640
  %v1642 = vsel %vm1641, %v1634, %v1638
  %v1643 = vand.u32 2147483647, %v1468
  %vm1644 = vcmp.eq.f32.partialorder %v1643, 8.507059e+37
  %v1645 = vand.u32 %v1468, 2147483648
  %v1646 = vor.u32 1.1754944e-38, %v1645
  %v1647 = vsel %vm1644, %v1646, %v1642
  %v1648 = vmul.f32 %v1425, %v1647
  %v1649 = vrcp.pop %v1471
  %v1650 = vmul.f32 %v1471, %v1649
  %v1651 = vsub.f32 1.0, %v1650
  %v1652 = vmul.f32 %v1649, %v1651
  %v1653 = vadd.f32 %v1649, %v1652
  %vm1654 = vweird.f32 %v1471
  %vm1655 = vweird.f32 %v1649
  %vm1656 = vmor %vm1654, %vm1655
  %v1657 = vsel %vm1656, %v1649, %v1653
  %v1658 = vand.u32 2147483647, %v1471
  %vm1659 = vcmp.eq.f32.partialorder %v1658, 8.507059e+37
  %v1660 = vand.u32 %v1471, 2147483648
  %v1661 = vor.u32 1.1754944e-38, %v1660
  %v1662 = vsel %vm1659, %v1661, %v1657
  %v1663 = vmul.f32 %v1427, %v1662
  %v1664 = vrcp.pop %v1474
  %v1665 = vmul.f32 %v1474, %v1664
  %v1666 = vsub.f32 1.0, %v1665
  %v1667 = vmul.f32 %v1664, %v1666
  %v1668 = vadd.f32 %v1664, %v1667
  %vm1669 = vweird.f32 %v1474
  %vm1670 = vweird.f32 %v1664
  %vm1671 = vmor %vm1669, %vm1670
  %v1672 = vsel %vm1671, %v1664, %v1668
  %v1673 = vand.u32 2147483647, %v1474
  %vm1674 = vcmp.eq.f32.partialorder %v1673, 8.507059e+37
  %v1675 = vand.u32 %v1474, 2147483648
  %v1676 = vor.u32 1.1754944e-38, %v1675
  %v1677 = vsel %vm1674, %v1676, %v1672
  %v1678 = vmul.f32 %v1429, %v1677
  %v1679 = vrcp.pop %v1477
  %v1680 = vmul.f32 %v1477, %v1679
  %v1681 = vsub.f32 1.0, %v1680
  %v1682 = vmul.f32 %v1679, %v1681
  %v1683 = vadd.f32 %v1679, %v1682
  %vm1684 = vweird.f32 %v1477
  %vm1685 = vweird.f32 %v1679
  %vm1686 = vmor %vm1684, %vm1685
  %v1687 = vsel %vm1686, %v1679, %v1683
  %v1688 = vand.u32 2147483647, %v1477
  %vm1689 = vcmp.eq.f32.partialorder %v1688, 8.507059e+37
  %v1690 = vand.u32 %v1477, 2147483648
  %v1691 = vor.u32 1.1754944e-38, %v1690
  %v1692 = vsel %vm1689, %v1691, %v1687
  %v1693 = vmul.f32 %v1431, %v1692
  %v1694 = vrcp.pop %v1480
  %v1695 = vmul.f32 %v1480, %v1694
  %v1696 = vsub.f32 1.0, %v1695
  %v1697 = vmul.f32 %v1694, %v1696
  %v1698 = vadd.f32 %v1694, %v1697
  %vm1699 = vweird.f32 %v1480
  %vm1700 = vweird.f32 %v1694
  %vm1701 = vmor %vm1699, %vm1700
  %v1702 = vsel %vm1701, %v1694, %v1698
  %v1703 = vand.u32 2147483647, %v1480
  %vm1704 = vcmp.eq.f32.partialorder %v1703, 8.507059e+37
  %v1705 = vand.u32 %v1480, 2147483648
  %v1706 = vor.u32 1.1754944e-38, %v1705
  %v1707 = vsel %vm1704, %v1706, %v1702
  %v1708 = vmul.f32 %v1433, %v1707
  %v1709 = vrcp.pop %v1483
  %v1710 = vmul.f32 %v1483, %v1709
  %v1711 = vsub.f32 1.0, %v1710
  %v1712 = vmul.f32 %v1709, %v1711
  %v1713 = vadd.f32 %v1709, %v1712
  %vm1714 = vweird.f32 %v1483
  %vm1715 = vweird.f32 %v1709
  %vm1716 = vmor %vm1714, %vm1715
  %v1717 = vsel %vm1716, %v1709, %v1713
  %v1718 = vand.u32 2147483647, %v1483
  %vm1719 = vcmp.eq.f32.partialorder %v1718, 8.507059e+37
  %v1720 = vand.u32 %v1483, 2147483648
  %v1721 = vor.u32 1.1754944e-38, %v1720
  %v1722 = vsel %vm1719, %v1721, %v1717
  %v1723 = vmul.f32 %v1435, %v1722
  %v1725 = vsel %vm900, %v773, 0
  %v1728 = vsel %vm900, %v1498, 0
  %1730 = vmatpush.xpose.msra.mxu0 0.0
  %1731 = vmatpush.xpose.msra.mxu0 0.0
  %1732 = vmatpush.xpose.msra.mxu0 0.0
  %1733 = vmatpush.xpose.msra.mxu0 0.0
  %1734 = vmatpush.xpose.msra.mxu0 0.0
  %1735 = vmatpush.xpose.msra.mxu0 0.0
  %1736 = vmatpush.xpose.msra.mxu0 0.0
  %1737 = vmatpush.xpose.msra.mxu0 0.0
  %1738 = vmatpush.xpose.msra.mxu0 0.0
  %1739 = vmatpush.xpose.msra.mxu0 0.0
  %1740 = vmatpush.xpose.msra.mxu0 0.0
  %1741 = vmatpush.xpose.msra.mxu0 0.0
  %1742 = vmatpush.xpose.msra.mxu0 0.0
  %1743 = vmatpush.xpose.msra.mxu0 0.0
  %1744 = vmatpush.xpose.msra.mxu0 0.0
  %1745 = vmatpush.xpose.msra.mxu0 %v1728
  %1746 = vmatmul.f32.gmra.mxu0 %v1725
  %v1747 = vpop.f32.mrf.mxu0
  %v1748 = vadd.f32 0.0, %v1747
  %1749 = vdwg.mxu0
  %v1751 = vsel %vm900, %v775, 0
  %v1754 = vsel %vm900, %v1513, 0
  %1756 = vmatpush.xpose.msra.mxu0 0.0
  %1757 = vmatpush.xpose.msra.mxu0 0.0
  %1758 = vmatpush.xpose.msra.mxu0 0.0
  %1759 = vmatpush.xpose.msra.mxu0 0.0
  %1760 = vmatpush.xpose.msra.mxu0 0.0
  %1761 = vmatpush.xpose.msra.mxu0 0.0
  %1762 = vmatpush.xpose.msra.mxu0 0.0
  %1763 = vmatpush.xpose.msra.mxu0 0.0
  %1764 = vmatpush.xpose.msra.mxu0 0.0
  %1765 = vmatpush.xpose.msra.mxu0 0.0
  %1766 = vmatpush.xpose.msra.mxu0 0.0
  %1767 = vmatpush.xpose.msra.mxu0 0.0
  %1768 = vmatpush.xpose.msra.mxu0 0.0
  %1769 = vmatpush.xpose.msra.mxu0 0.0
  %1770 = vmatpush.xpose.msra.mxu0 0.0
  %1771 = vmatpush.xpose.msra.mxu0 %v1754
  %1772 = vmatmul.f32.gmra.mxu0 %v1751
  %v1773 = vpop.f32.mrf.mxu0
  %v1774 = vadd.f32 0.0, %v1773
  %1775 = vdwg.mxu0
  %v1777 = vsel %vm900, %v777, 0
  %v1780 = vsel %vm900, %v1528, 0
  %1782 = vmatpush.xpose.msra.mxu0 0.0
  %1783 = vmatpush.xpose.msra.mxu0 0.0
  %1784 = vmatpush.xpose.msra.mxu0 0.0
  %1785 = vmatpush.xpose.msra.mxu0 0.0
  %1786 = vmatpush.xpose.msra.mxu0 0.0
  %1787 = vmatpush.xpose.msra.mxu0 0.0
  %1788 = vmatpush.xpose.msra.mxu0 0.0
  %1789 = vmatpush.xpose.msra.mxu0 0.0
  %1790 = vmatpush.xpose.msra.mxu0 0.0
  %1791 = vmatpush.xpose.msra.mxu0 0.0
  %1792 = vmatpush.xpose.msra.mxu0 0.0
  %1793 = vmatpush.xpose.msra.mxu0 0.0
  %1794 = vmatpush.xpose.msra.mxu0 0.0
  %1795 = vmatpush.xpose.msra.mxu0 0.0
  %1796 = vmatpush.xpose.msra.mxu0 0.0
  %1797 = vmatpush.xpose.msra.mxu0 %v1780
  %1798 = vmatmul.f32.gmra.mxu0 %v1777
  %v1799 = vpop.f32.mrf.mxu0
  %v1800 = vadd.f32 0.0, %v1799
  %1801 = vdwg.mxu0
  %v1803 = vsel %vm900, %v779, 0
  %v1806 = vsel %vm900, %v1543, 0
  %1808 = vmatpush.xpose.msra.mxu0 0.0
  %1809 = vmatpush.xpose.msra.mxu0 0.0
  %1810 = vmatpush.xpose.msra.mxu0 0.0
  %1811 = vmatpush.xpose.msra.mxu0 0.0
  %1812 = vmatpush.xpose.msra.mxu0 0.0
  %1813 = vmatpush.xpose.msra.mxu0 0.0
  %1814 = vmatpush.xpose.msra.mxu0 0.0
  %1815 = vmatpush.xpose.msra.mxu0 0.0
  %1816 = vmatpush.xpose.msra.mxu0 0.0
  %1817 = vmatpush.xpose.msra.mxu0 0.0
  %1818 = vmatpush.xpose.msra.mxu0 0.0
  %1819 = vmatpush.xpose.msra.mxu0 0.0
  %1820 = vmatpush.xpose.msra.mxu0 0.0
  %1821 = vmatpush.xpose.msra.mxu0 0.0
  %1822 = vmatpush.xpose.msra.mxu0 0.0
  %1823 = vmatpush.xpose.msra.mxu0 %v1806
  %1824 = vmatmul.f32.gmra.mxu0 %v1803
  %v1825 = vpop.f32.mrf.mxu0
  %v1826 = vadd.f32 0.0, %v1825
  %1827 = vdwg.mxu0
  %v1829 = vsel %vm900, %v781, 0
  %v1832 = vsel %vm900, %v1558, 0
  %1834 = vmatpush.xpose.msra.mxu0 0.0
  %1835 = vmatpush.xpose.msra.mxu0 0.0
  %1836 = vmatpush.xpose.msra.mxu0 0.0
  %1837 = vmatpush.xpose.msra.mxu0 0.0
  %1838 = vmatpush.xpose.msra.mxu0 0.0
  %1839 = vmatpush.xpose.msra.mxu0 0.0
  %1840 = vmatpush.xpose.msra.mxu0 0.0
  %1841 = vmatpush.xpose.msra.mxu0 0.0
  %1842 = vmatpush.xpose.msra.mxu0 0.0
  %1843 = vmatpush.xpose.msra.mxu0 0.0
  %1844 = vmatpush.xpose.msra.mxu0 0.0
  %1845 = vmatpush.xpose.msra.mxu0 0.0
  %1846 = vmatpush.xpose.msra.mxu0 0.0
  %1847 = vmatpush.xpose.msra.mxu0 0.0
  %1848 = vmatpush.xpose.msra.mxu0 0.0
  %1849 = vmatpush.xpose.msra.mxu0 %v1832
  %1850 = vmatmul.f32.gmra.mxu0 %v1829
  %v1851 = vpop.f32.mrf.mxu0
  %v1852 = vadd.f32 0.0, %v1851
  %1853 = vdwg.mxu0
  %v1855 = vsel %vm900, %v783, 0
  %v1858 = vsel %vm900, %v1573, 0
  %1860 = vmatpush.xpose.msra.mxu0 0.0
  %1861 = vmatpush.xpose.msra.mxu0 0.0
  %1862 = vmatpush.xpose.msra.mxu0 0.0
  %1863 = vmatpush.xpose.msra.mxu0 0.0
  %1864 = vmatpush.xpose.msra.mxu0 0.0
  %1865 = vmatpush.xpose.msra.mxu0 0.0
  %1866 = vmatpush.xpose.msra.mxu0 0.0
  %1867 = vmatpush.xpose.msra.mxu0 0.0
  %1868 = vmatpush.xpose.msra.mxu0 0.0
  %1869 = vmatpush.xpose.msra.mxu0 0.0
  %1870 = vmatpush.xpose.msra.mxu0 0.0
  %1871 = vmatpush.xpose.msra.mxu0 0.0
  %1872 = vmatpush.xpose.msra.mxu0 0.0
  %1873 = vmatpush.xpose.msra.mxu0 0.0
  %1874 = vmatpush.xpose.msra.mxu0 0.0
  %1875 = vmatpush.xpose.msra.mxu0 %v1858
  %1876 = vmatmul.f32.gmra.mxu0 %v1855
  %v1877 = vpop.f32.mrf.mxu0
  %v1878 = vadd.f32 0.0, %v1877
  %1879 = vdwg.mxu0
  %v1881 = vsel %vm900, %v785, 0
  %v1884 = vsel %vm900, %v1588, 0
  %1886 = vmatpush.xpose.msra.mxu0 0.0
  %1887 = vmatpush.xpose.msra.mxu0 0.0
  %1888 = vmatpush.xpose.msra.mxu0 0.0
  %1889 = vmatpush.xpose.msra.mxu0 0.0
  %1890 = vmatpush.xpose.msra.mxu0 0.0
  %1891 = vmatpush.xpose.msra.mxu0 0.0
  %1892 = vmatpush.xpose.msra.mxu0 0.0
  %1893 = vmatpush.xpose.msra.mxu0 0.0
  %1894 = vmatpush.xpose.msra.mxu0 0.0
  %1895 = vmatpush.xpose.msra.mxu0 0.0
  %1896 = vmatpush.xpose.msra.mxu0 0.0
  %1897 = vmatpush.xpose.msra.mxu0 0.0
  %1898 = vmatpush.xpose.msra.mxu0 0.0
  %1899 = vmatpush.xpose.msra.mxu0 0.0
  %1900 = vmatpush.xpose.msra.mxu0 0.0
  %1901 = vmatpush.xpose.msra.mxu0 %v1884
  %1902 = vmatmul.f32.gmra.mxu0 %v1881
  %v1903 = vpop.f32.mrf.mxu0
  %v1904 = vadd.f32 0.0, %v1903
  %1905 = vdwg.mxu0
  %v1907 = vsel %vm900, %v787, 0
  %v1910 = vsel %vm900, %v1603, 0
  %1912 = vmatpush.xpose.msra.mxu0 0.0
  %1913 = vmatpush.xpose.msra.mxu0 0.0
  %1914 = vmatpush.xpose.msra.mxu0 0.0
  %1915 = vmatpush.xpose.msra.mxu0 0.0
  %1916 = vmatpush.xpose.msra.mxu0 0.0
  %1917 = vmatpush.xpose.msra.mxu0 0.0
  %1918 = vmatpush.xpose.msra.mxu0 0.0
  %1919 = vmatpush.xpose.msra.mxu0 0.0
  %1920 = vmatpush.xpose.msra.mxu0 0.0
  %1921 = vmatpush.xpose.msra.mxu0 0.0
  %1922 = vmatpush.xpose.msra.mxu0 0.0
  %1923 = vmatpush.xpose.msra.mxu0 0.0
  %1924 = vmatpush.xpose.msra.mxu0 0.0
  %1925 = vmatpush.xpose.msra.mxu0 0.0
  %1926 = vmatpush.xpose.msra.mxu0 0.0
  %1927 = vmatpush.xpose.msra.mxu0 %v1910
  %1928 = vmatmul.f32.gmra.mxu0 %v1907
  %v1929 = vpop.f32.mrf.mxu0
  %v1930 = vadd.f32 0.0, %v1929
  %1931 = vdwg.mxu0
  %v1933 = vsel %vm900, %v885, 0
  %v1936 = vsel %vm900, %v1618, 0
  %1938 = vmatpush.xpose.msra.mxu0 0.0
  %1939 = vmatpush.xpose.msra.mxu0 0.0
  %1940 = vmatpush.xpose.msra.mxu0 0.0
  %1941 = vmatpush.xpose.msra.mxu0 0.0
  %1942 = vmatpush.xpose.msra.mxu0 0.0
  %1943 = vmatpush.xpose.msra.mxu0 0.0
  %1944 = vmatpush.xpose.msra.mxu0 0.0
  %1945 = vmatpush.xpose.msra.mxu0 0.0
  %1946 = vmatpush.xpose.msra.mxu0 0.0
  %1947 = vmatpush.xpose.msra.mxu0 0.0
  %1948 = vmatpush.xpose.msra.mxu0 0.0
  %1949 = vmatpush.xpose.msra.mxu0 0.0
  %1950 = vmatpush.xpose.msra.mxu0 0.0
  %1951 = vmatpush.xpose.msra.mxu0 0.0
  %1952 = vmatpush.xpose.msra.mxu0 0.0
  %1953 = vmatpush.xpose.msra.mxu0 %v1936
  %1954 = vmatmul.f32.gmra.mxu0 %v1933
  %v1955 = vpop.f32.mrf.mxu0
  %v1956 = vadd.f32 0.0, %v1955
  %1957 = vdwg.mxu0
  %v1959 = vsel %vm900, %v887, 0
  %v1962 = vsel %vm900, %v1633, 0
  %1964 = vmatpush.xpose.msra.mxu0 0.0
  %1965 = vmatpush.xpose.msra.mxu0 0.0
  %1966 = vmatpush.xpose.msra.mxu0 0.0
  %1967 = vmatpush.xpose.msra.mxu0 0.0
  %1968 = vmatpush.xpose.msra.mxu0 0.0
  %1969 = vmatpush.xpose.msra.mxu0 0.0
  %1970 = vmatpush.xpose.msra.mxu0 0.0
  %1971 = vmatpush.xpose.msra.mxu0 0.0
  %1972 = vmatpush.xpose.msra.mxu0 0.0
  %1973 = vmatpush.xpose.msra.mxu0 0.0
  %1974 = vmatpush.xpose.msra.mxu0 0.0
  %1975 = vmatpush.xpose.msra.mxu0 0.0
  %1976 = vmatpush.xpose.msra.mxu0 0.0
  %1977 = vmatpush.xpose.msra.mxu0 0.0
  %1978 = vmatpush.xpose.msra.mxu0 0.0
  %1979 = vmatpush.xpose.msra.mxu0 %v1962
  %1980 = vmatmul.f32.gmra.mxu0 %v1959
  %v1981 = vpop.f32.mrf.mxu0
  %v1982 = vadd.f32 0.0, %v1981
  %1983 = vdwg.mxu0
  %v1985 = vsel %vm900, %v889, 0
  %v1988 = vsel %vm900, %v1648, 0
  %1990 = vmatpush.xpose.msra.mxu0 0.0
  %1991 = vmatpush.xpose.msra.mxu0 0.0
  %1992 = vmatpush.xpose.msra.mxu0 0.0
  %1993 = vmatpush.xpose.msra.mxu0 0.0
  %1994 = vmatpush.xpose.msra.mxu0 0.0
  %1995 = vmatpush.xpose.msra.mxu0 0.0
  %1996 = vmatpush.xpose.msra.mxu0 0.0
  %1997 = vmatpush.xpose.msra.mxu0 0.0
  %1998 = vmatpush.xpose.msra.mxu0 0.0
  %1999 = vmatpush.xpose.msra.mxu0 0.0
  %2000 = vmatpush.xpose.msra.mxu0 0.0
  %2001 = vmatpush.xpose.msra.mxu0 0.0
  %2002 = vmatpush.xpose.msra.mxu0 0.0
  %2003 = vmatpush.xpose.msra.mxu0 0.0
  %2004 = vmatpush.xpose.msra.mxu0 0.0
  %2005 = vmatpush.xpose.msra.mxu0 %v1988
  %2006 = vmatmul.f32.gmra.mxu0 %v1985
  %v2007 = vpop.f32.mrf.mxu0
  %v2008 = vadd.f32 0.0, %v2007
  %2009 = vdwg.mxu0
  %v2011 = vsel %vm900, %v891, 0
  %v2014 = vsel %vm900, %v1663, 0
  %2016 = vmatpush.xpose.msra.mxu0 0.0
  %2017 = vmatpush.xpose.msra.mxu0 0.0
  %2018 = vmatpush.xpose.msra.mxu0 0.0
  %2019 = vmatpush.xpose.msra.mxu0 0.0
  %2020 = vmatpush.xpose.msra.mxu0 0.0
  %2021 = vmatpush.xpose.msra.mxu0 0.0
  %2022 = vmatpush.xpose.msra.mxu0 0.0
  %2023 = vmatpush.xpose.msra.mxu0 0.0
  %2024 = vmatpush.xpose.msra.mxu0 0.0
  %2025 = vmatpush.xpose.msra.mxu0 0.0
  %2026 = vmatpush.xpose.msra.mxu0 0.0
  %2027 = vmatpush.xpose.msra.mxu0 0.0
  %2028 = vmatpush.xpose.msra.mxu0 0.0
  %2029 = vmatpush.xpose.msra.mxu0 0.0
  %2030 = vmatpush.xpose.msra.mxu0 0.0
  %2031 = vmatpush.xpose.msra.mxu0 %v2014
  %2032 = vmatmul.f32.gmra.mxu0 %v2011
  %v2033 = vpop.f32.mrf.mxu0
  %v2034 = vadd.f32 0.0, %v2033
  %2035 = vdwg.mxu0
  %v2037 = vsel %vm900, %v893, 0
  %v2040 = vsel %vm900, %v1678, 0
  %2042 = vmatpush.xpose.msra.mxu0 0.0
  %2043 = vmatpush.xpose.msra.mxu0 0.0
  %2044 = vmatpush.xpose.msra.mxu0 0.0
  %2045 = vmatpush.xpose.msra.mxu0 0.0
  %2046 = vmatpush.xpose.msra.mxu0 0.0
  %2047 = vmatpush.xpose.msra.mxu0 0.0
  %2048 = vmatpush.xpose.msra.mxu0 0.0
  %2049 = vmatpush.xpose.msra.mxu0 0.0
  %2050 = vmatpush.xpose.msra.mxu0 0.0
  %2051 = vmatpush.xpose.msra.mxu0 0.0
  %2052 = vmatpush.xpose.msra.mxu0 0.0
  %2053 = vmatpush.xpose.msra.mxu0 0.0
  %2054 = vmatpush.xpose.msra.mxu0 0.0
  %2055 = vmatpush.xpose.msra.mxu0 0.0
  %2056 = vmatpush.xpose.msra.mxu0 0.0
  %2057 = vmatpush.xpose.msra.mxu0 %v2040
  %2058 = vmatmul.f32.gmra.mxu0 %v2037
  %v2059 = vpop.f32.mrf.mxu0
  %v2060 = vadd.f32 0.0, %v2059
  %2061 = vdwg.mxu0
  %v2063 = vsel %vm900, %v895, 0
  %v2066 = vsel %vm900, %v1693, 0
  %2068 = vmatpush.xpose.msra.mxu0 0.0
  %2069 = vmatpush.xpose.msra.mxu0 0.0
  %2070 = vmatpush.xpose.msra.mxu0 0.0
  %2071 = vmatpush.xpose.msra.mxu0 0.0
  %2072 = vmatpush.xpose.msra.mxu0 0.0
  %2073 = vmatpush.xpose.msra.mxu0 0.0
  %2074 = vmatpush.xpose.msra.mxu0 0.0
  %2075 = vmatpush.xpose.msra.mxu0 0.0
  %2076 = vmatpush.xpose.msra.mxu0 0.0
  %2077 = vmatpush.xpose.msra.mxu0 0.0
  %2078 = vmatpush.xpose.msra.mxu0 0.0
  %2079 = vmatpush.xpose.msra.mxu0 0.0
  %2080 = vmatpush.xpose.msra.mxu0 0.0
  %2081 = vmatpush.xpose.msra.mxu0 0.0
  %2082 = vmatpush.xpose.msra.mxu0 0.0
  %2083 = vmatpush.xpose.msra.mxu0 %v2066
  %2084 = vmatmul.f32.gmra.mxu0 %v2063
  %v2085 = vpop.f32.mrf.mxu0
  %v2086 = vadd.f32 0.0, %v2085
  %2087 = vdwg.mxu0
  %v2089 = vsel %vm900, %v897, 0
  %v2092 = vsel %vm900, %v1708, 0
  %2094 = vmatpush.xpose.msra.mxu0 0.0
  %2095 = vmatpush.xpose.msra.mxu0 0.0
  %2096 = vmatpush.xpose.msra.mxu0 0.0
  %2097 = vmatpush.xpose.msra.mxu0 0.0
  %2098 = vmatpush.xpose.msra.mxu0 0.0
  %2099 = vmatpush.xpose.msra.mxu0 0.0
  %2100 = vmatpush.xpose.msra.mxu0 0.0
  %2101 = vmatpush.xpose.msra.mxu0 0.0
  %2102 = vmatpush.xpose.msra.mxu0 0.0
  %2103 = vmatpush.xpose.msra.mxu0 0.0
  %2104 = vmatpush.xpose.msra.mxu0 0.0
  %2105 = vmatpush.xpose.msra.mxu0 0.0
  %2106 = vmatpush.xpose.msra.mxu0 0.0
  %2107 = vmatpush.xpose.msra.mxu0 0.0
  %2108 = vmatpush.xpose.msra.mxu0 0.0
  %2109 = vmatpush.xpose.msra.mxu0 %v2092
  %2110 = vmatmul.f32.gmra.mxu0 %v2089
  %v2111 = vpop.f32.mrf.mxu0
  %v2112 = vadd.f32 0.0, %v2111
  %2113 = vdwg.mxu0
  %v2115 = vsel %vm900, %v899, 0
  %v2118 = vsel %vm900, %v1723, 0
  %2120 = vmatpush.xpose.msra.mxu0 0.0
  %2121 = vmatpush.xpose.msra.mxu0 0.0
  %2122 = vmatpush.xpose.msra.mxu0 0.0
  %2123 = vmatpush.xpose.msra.mxu0 0.0
  %2124 = vmatpush.xpose.msra.mxu0 0.0
  %2125 = vmatpush.xpose.msra.mxu0 0.0
  %2126 = vmatpush.xpose.msra.mxu0 0.0
  %2127 = vmatpush.xpose.msra.mxu0 0.0
  %2128 = vmatpush.xpose.msra.mxu0 0.0
  %2129 = vmatpush.xpose.msra.mxu0 0.0
  %2130 = vmatpush.xpose.msra.mxu0 0.0
  %2131 = vmatpush.xpose.msra.mxu0 0.0
  %2132 = vmatpush.xpose.msra.mxu0 0.0
  %2133 = vmatpush.xpose.msra.mxu0 0.0
  %2134 = vmatpush.xpose.msra.mxu0 0.0
  %2135 = vmatpush.xpose.msra.mxu0 %v2118
  %2136 = vmatmul.f32.gmra.mxu0 %v2115
  %v2137 = vpop.f32.mrf.mxu0
  %v2138 = vadd.f32 0.0, %v2137
  %2139 = vdwg.mxu0
  %v2140 = vrot.slane %v1800, 4
  %v2141 = vsel %vm136, %v2140, %v1748
  %v2142 = vrot.slane %v1748, 4
  %v2143 = vsel %vm136, %v1800, %v2142
  %v2145 = vunpack.c.l.s4 1983009808
  %v2146 = vunpack.c.0.s8 %v2145
  %v2147 = vperm.slane %v2141, %v2146
  %v2149 = vunpack.c.l.s4 1983009808
  %v2150 = vunpack.c.0.s8 %v2149
  %v2151 = vperm.slane %v2143, %v2150
  %v2152 = vrot.slane %v1826, 4
  %v2153 = vsel %vm136, %v2152, %v1774
  %v2154 = vrot.slane %v1774, 4
  %v2155 = vsel %vm136, %v1826, %v2154
  %v2157 = vunpack.c.l.s4 1983009808
  %v2158 = vunpack.c.0.s8 %v2157
  %v2159 = vperm.slane %v2153, %v2158
  %v2161 = vunpack.c.l.s4 1983009808
  %v2162 = vunpack.c.0.s8 %v2161
  %v2163 = vperm.slane %v2155, %v2162
  %v2164 = vrot.slane %v1904, 4
  %v2165 = vsel %vm136, %v2164, %v1852
  %v2166 = vrot.slane %v1852, 4
  %v2167 = vsel %vm136, %v1904, %v2166
  %v2169 = vunpack.c.l.s4 1983009808
  %v2170 = vunpack.c.0.s8 %v2169
  %v2171 = vperm.slane %v2165, %v2170
  %v2173 = vunpack.c.l.s4 1983009808
  %v2174 = vunpack.c.0.s8 %v2173
  %v2175 = vperm.slane %v2167, %v2174
  %v2176 = vrot.slane %v1930, 4
  %v2177 = vsel %vm136, %v2176, %v1878
  %v2178 = vrot.slane %v1878, 4
  %v2179 = vsel %vm136, %v1930, %v2178
  %v2181 = vunpack.c.l.s4 1983009808
  %v2182 = vunpack.c.0.s8 %v2181
  %v2183 = vperm.slane %v2177, %v2182
  %v2185 = vunpack.c.l.s4 1983009808
  %v2186 = vunpack.c.0.s8 %v2185
  %v2187 = vperm.slane %v2179, %v2186
  %v2188 = vrot.slane %v2159, 4
  %v2189 = vsel %vm136, %v2188, %v2147
  %v2190 = vrot.slane %v2147, 4
  %v2191 = vsel %vm136, %v2159, %v2190
  %v2193 = vunpack.c.l.s4 1934713408
  %v2194 = vunpack.c.0.s8 %v2193
  %v2195 = vperm.slane %v2189, %v2194
  %v2197 = vunpack.c.l.s4 1934713408
  %v2198 = vunpack.c.0.s8 %v2197
  %v2199 = vperm.slane %v2191, %v2198
  %v2200 = vrot.slane %v2163, 4
  %v2201 = vsel %vm136, %v2200, %v2151
  %v2202 = vrot.slane %v2151, 4
  %v2203 = vsel %vm136, %v2163, %v2202
  %v2205 = vunpack.c.l.s4 1934713408
  %v2206 = vunpack.c.0.s8 %v2205
  %v2207 = vperm.slane %v2201, %v2206
  %v2209 = vunpack.c.l.s4 1934713408
  %v2210 = vunpack.c.0.s8 %v2209
  %v2211 = vperm.slane %v2203, %v2210
  %v2212 = vrot.slane %v2183, 4
  %v2213 = vsel %vm136, %v2212, %v2171
  %v2214 = vrot.slane %v2171, 4
  %v2215 = vsel %vm136, %v2183, %v2214
  %v2217 = vunpack.c.l.s4 1934713408
  %v2218 = vunpack.c.0.s8 %v2217
  %v2219 = vperm.slane %v2213, %v2218
  %v2221 = vunpack.c.l.s4 1934713408
  %v2222 = vunpack.c.0.s8 %v2221
  %v2223 = vperm.slane %v2215, %v2222
  %v2224 = vrot.slane %v2187, 4
  %v2225 = vsel %vm136, %v2224, %v2175
  %v2226 = vrot.slane %v2175, 4
  %v2227 = vsel %vm136, %v2187, %v2226
  %v2229 = vunpack.c.l.s4 1934713408
  %v2230 = vunpack.c.0.s8 %v2229
  %v2231 = vperm.slane %v2225, %v2230
  %v2233 = vunpack.c.l.s4 1934713408
  %v2234 = vunpack.c.0.s8 %v2233
  %v2235 = vperm.slane %v2227, %v2234
  %v2236 = vrot.slane %v2219, 4
  %v2237 = vsel %vm136, %v2236, %v2195
  %v2238 = vrot.slane %v2195, 4
  %v2239 = vsel %vm136, %v2219, %v2238
  %v2240 = vrot.slane %v2223, 4
  %v2241 = vsel %vm136, %v2240, %v2199
  %v2242 = vrot.slane %v2199, 4
  %v2243 = vsel %vm136, %v2223, %v2242
  %v2244 = vrot.slane %v2231, 4
  %v2245 = vsel %vm136, %v2244, %v2207
  %v2246 = vrot.slane %v2207, 4
  %v2247 = vsel %vm136, %v2231, %v2246
  %v2248 = vrot.slane %v2235, 4
  %v2249 = vsel %vm136, %v2248, %v2211
  %v2250 = vrot.slane %v2211, 4
  %v2251 = vsel %vm136, %v2235, %v2250
  %v2252 = vrot.slane %v2008, 4
  %v2253 = vsel %vm136, %v2252, %v1956
  %v2254 = vrot.slane %v1956, 4
  %v2255 = vsel %vm136, %v2008, %v2254
  %v2257 = vunpack.c.l.s4 1983009808
  %v2258 = vunpack.c.0.s8 %v2257
  %v2259 = vperm.slane %v2253, %v2258
  %v2261 = vunpack.c.l.s4 1983009808
  %v2262 = vunpack.c.0.s8 %v2261
  %v2263 = vperm.slane %v2255, %v2262
  %v2264 = vrot.slane %v2034, 4
  %v2265 = vsel %vm136, %v2264, %v1982
  %v2266 = vrot.slane %v1982, 4
  %v2267 = vsel %vm136, %v2034, %v2266
  %v2269 = vunpack.c.l.s4 1983009808
  %v2270 = vunpack.c.0.s8 %v2269
  %v2271 = vperm.slane %v2265, %v2270
  %v2273 = vunpack.c.l.s4 1983009808
  %v2274 = vunpack.c.0.s8 %v2273
  %v2275 = vperm.slane %v2267, %v2274
  %v2276 = vrot.slane %v2112, 4
  %v2277 = vsel %vm136, %v2276, %v2060
  %v2278 = vrot.slane %v2060, 4
  %v2279 = vsel %vm136, %v2112, %v2278
  %v2281 = vunpack.c.l.s4 1983009808
  %v2282 = vunpack.c.0.s8 %v2281
  %v2283 = vperm.slane %v2277, %v2282
  %v2285 = vunpack.c.l.s4 1983009808
  %v2286 = vunpack.c.0.s8 %v2285
  %v2287 = vperm.slane %v2279, %v2286
  %v2288 = vrot.slane %v2138, 4
  %v2289 = vsel %vm136, %v2288, %v2086
  %v2290 = vrot.slane %v2086, 4
  %v2291 = vsel %vm136, %v2138, %v2290
  %v2293 = vunpack.c.l.s4 1983009808
  %v2294 = vunpack.c.0.s8 %v2293
  %v2295 = vperm.slane %v2289, %v2294
  %v2297 = vunpack.c.l.s4 1983009808
  %v2298 = vunpack.c.0.s8 %v2297
  %v2299 = vperm.slane %v2291, %v2298
  %v2300 = vrot.slane %v2271, 4
  %v2301 = vsel %vm136, %v2300, %v2259
  %v2302 = vrot.slane %v2259, 4
  %v2303 = vsel %vm136, %v2271, %v2302
  %v2305 = vunpack.c.l.s4 1934713408
  %v2306 = vunpack.c.0.s8 %v2305
  %v2307 = vperm.slane %v2301, %v2306
  %v2309 = vunpack.c.l.s4 1934713408
  %v2310 = vunpack.c.0.s8 %v2309
  %v2311 = vperm.slane %v2303, %v2310
  %v2312 = vrot.slane %v2275, 4
  %v2313 = vsel %vm136, %v2312, %v2263
  %v2314 = vrot.slane %v2263, 4
  %v2315 = vsel %vm136, %v2275, %v2314
  %v2317 = vunpack.c.l.s4 1934713408
  %v2318 = vunpack.c.0.s8 %v2317
  %v2319 = vperm.slane %v2313, %v2318
  %v2321 = vunpack.c.l.s4 1934713408
  %v2322 = vunpack.c.0.s8 %v2321
  %v2323 = vperm.slane %v2315, %v2322
  %v2324 = vrot.slane %v2295, 4
  %v2325 = vsel %vm136, %v2324, %v2283
  %v2326 = vrot.slane %v2283, 4
  %v2327 = vsel %vm136, %v2295, %v2326
  %v2329 = vunpack.c.l.s4 1934713408
  %v2330 = vunpack.c.0.s8 %v2329
  %v2331 = vperm.slane %v2325, %v2330
  %v2333 = vunpack.c.l.s4 1934713408
  %v2334 = vunpack.c.0.s8 %v2333
  %v2335 = vperm.slane %v2327, %v2334
  %v2336 = vrot.slane %v2299, 4
  %v2337 = vsel %vm136, %v2336, %v2287
  %v2338 = vrot.slane %v2287, 4
  %v2339 = vsel %vm136, %v2299, %v2338
  %v2341 = vunpack.c.l.s4 1934713408
  %v2342 = vunpack.c.0.s8 %v2341
  %v2343 = vperm.slane %v2337, %v2342
  %v2345 = vunpack.c.l.s4 1934713408
  %v2346 = vunpack.c.0.s8 %v2345
  %v2347 = vperm.slane %v2339, %v2346
  %v2348 = vrot.slane %v2331, 4
  %v2349 = vsel %vm136, %v2348, %v2307
  %v2350 = vrot.slane %v2307, 4
  %v2351 = vsel %vm136, %v2331, %v2350
  %v2352 = vrot.slane %v2335, 4
  %v2353 = vsel %vm136, %v2352, %v2311
  %v2354 = vrot.slane %v2311, 4
  %v2355 = vsel %vm136, %v2335, %v2354
  %v2356 = vrot.slane %v2343, 4
  %v2357 = vsel %vm136, %v2356, %v2319
  %v2358 = vrot.slane %v2319, 4
  %v2359 = vsel %vm136, %v2343, %v2358
  %v2360 = vrot.slane %v2347, 4
  %v2361 = vsel %vm136, %v2360, %v2323
  %v2362 = vrot.slane %v2323, 4
  %v2363 = vsel %vm136, %v2347, %v2362
  %2366 = vrot.lane.b32.xlu0 %v2239, 8
  %v2367 = vpop.permute.xlu0 %2366
  %2368 = vrot.lane.b32.xlu0 %v2351, 8
  %v2369 = vpop.permute.xlu0 %2368
  %2374 = vrot.lane.b32.xlu0 %v2241, 16
  %v2375 = vpop.permute.xlu0 %2374
  %2376 = vrot.lane.b32.xlu0 %v2353, 16
  %v2377 = vpop.permute.xlu0 %2376
  %2382 = vrot.lane.b32.xlu0 %v2243, 24
  %v2383 = vpop.permute.xlu0 %2382
  %2384 = vrot.lane.b32.xlu0 %v2355, 24
  %v2385 = vpop.permute.xlu0 %2384
  %2390 = vrot.lane.b32.xlu0 %v2245, 32
  %v2391 = vpop.permute.xlu0 %2390
  %2392 = vrot.lane.b32.xlu0 %v2357, 32
  %v2393 = vpop.permute.xlu0 %2392
  %2398 = vrot.lane.b32.xlu0 %v2247, 40
  %v2399 = vpop.permute.xlu0 %2398
  %2400 = vrot.lane.b32.xlu0 %v2359, 40
  %v2401 = vpop.permute.xlu0 %2400
  %2406 = vrot.lane.b32.xlu0 %v2249, 48
  %v2407 = vpop.permute.xlu0 %2406
  %2408 = vrot.lane.b32.xlu0 %v2361, 48
  %v2409 = vpop.permute.xlu0 %2408
  %2414 = vrot.lane.b32.xlu0 %v2251, 56
  %v2415 = vpop.permute.xlu0 %2414
  %2416 = vrot.lane.b32.xlu0 %v2363, 56
  %v2417 = vpop.permute.xlu0 %2416
  %v2420 = vsel %vm900, %v2237, %v2367
  %v2421 = vsel %vm900, %v2349, %v2369
  %vm2422 = vcmask 130048
  %v2423 = vsel %vm2422, %v2420, %v2375
  %v2424 = vsel %vm2422, %v2421, %v2377
  %vm2425 = vcmask 195584
  %v2426 = vsel %vm2425, %v2423, %v2383
  %v2427 = vsel %vm2425, %v2424, %v2385
  %vm2428 = vcmask 261120
  %v2429 = vsel %vm2428, %v2426, %v2391
  %v2430 = vsel %vm2428, %v2427, %v2393
  %vm2431 = vcmask 326656
  %v2432 = vsel %vm2431, %v2429, %v2399
  %v2433 = vsel %vm2431, %v2430, %v2401
  %vm2434 = vcmask 392192
  %v2435 = vsel %vm2434, %v2432, %v2407
  %v2436 = vsel %vm2434, %v2433, %v2409
  %vm2437 = vcmask 457728
  %v2438 = vsel %vm2437, %v2435, %v2415
  %v2439 = vsel %vm2437, %v2436, %v2417
  %v2440 = vadd.f32 %v2438, %v14
  %v2441 = vadd.f32 %v2439, %v15
  %2443 = vrot.lane.b32.xlu0 %v2441, 64
  %v2444 = vpop.permute.xlu0 %2443
  %v2446 = vsel %vm38, %v2440, %v2444
  %2447 = vst [vmem:[%s3] sm:$0xff] %v2446
  // Predicated region
  $region14: #{self_attention_pallas.1} parent=0 // pred_check
    _
  $region15: #{self_attention_pallas.1} parent=0 // pred_check_branch
    %2449 = sbr.rel (0) target = $region17
  $region16: #{self_attention_pallas.1} parent=0 // pred_region
    _
  $region17: #{self_attention_pallas.1} parent=0 // pred_fallthru
    _
  // Predicated region
  $region18: #{self_attention_pallas.1} parent=0 // pred_check
    _
  $region19: #{self_attention_pallas.1} parent=0 // pred_check_branch
    %2451 = sbr.rel (0) target = $region21
  $region20: #{self_attention_pallas.1} parent=0 // pred_region
    _
  $region21: #{self_attention_pallas.1} parent=0 // pred_fallthru
    _

</llo_original>
